<compile_context>
chip_gen: v5e
topology: v5e:2x2
jax: 0.10.0
libtpu: 0.0.40
codegen_flags: <defaults>
</compile_context>

<pallas_src>
import functools

import jax
import jax.numpy as jnp
from jax import lax
from jax.experimental import pallas as pl
from jax.experimental.pallas import tpu as pltpu


def _round_up(v, m):
    return -(-v // m) * m


# ---------------------------------------------------------------------------
# Pass 1: conv GEMM + per-image BatchNorm statistics
# ---------------------------------------------------------------------------
def _conv_stats_kernel(x_ref, w_ref, y_ref, sum_ref, sq_ref, acc_ref, *,
                       toh, tm, kh, stride, oc):
    """One (image, output-row-tile) grid step.

    x_ref  : (S, Hq, OW, KW*Cin)  bf16  stride-folded, width-im2col'd image
    w_ref  : (KH, KW*Cin, OCp)    bf16  resident weights
    y_ref  : (OC, tm)             f32   conv tile, transposed (OH*OW lane-dense)
    sum_ref/sq_ref : (1, OCp)     f32   per-image channel sum / sum-of-squares
    acc_ref: (tm, OCp)            f32   VMEM accumulator scratch
    """
    t = pl.program_id(1)

    # Per-image stats init (t is the innermost, "arbitrary" axis).
    @pl.when(t == 0)
    def _():
        sum_ref[...] = jnp.zeros_like(sum_ref)
        sq_ref[...] = jnp.zeros_like(sq_ref)

    row_base = pl.multiple_of(t * toh, toh)

    # KH accumulating MXU dots, each contracting K = KW*Cin.  Both strides
    # were folded into the host-side layout -> dense slices only.
    for i in range(kh):
        grp = i % stride          # row de-interleave group (static)
        off = i // stride         # row offset inside the group (static)
        slab = x_ref[grp, pl.ds(row_base + off, toh), :, :]      # (toh, OW, KW*Cin)
        d = jnp.dot(slab.reshape(tm, slab.shape[-1]), w_ref[i],
                    preferred_element_type=jnp.float32)           # (tm, OCp)
        if i == 0:
            acc_ref[...] = d
        else:
            acc_ref[...] += d

    acc = acc_ref[...]
    sum_ref[...] += jnp.sum(acc, axis=0, keepdims=True)
    sq_ref[...] += jnp.sum(acc * acc, axis=0, keepdims=True)
    # Store transposed + un-padded: OH*OW lane-dense, only the OC valid rows.
    y_ref[...] = jnp.transpose(acc)[:oc, :]


# ---------------------------------------------------------------------------
# Pass 2: streaming (y * scale + shift) -> ReLU on the (N, OC, OH*OW) layout
# ---------------------------------------------------------------------------
def _bn_relu_kernel(y_ref, scale_ref, shift_ref, o_ref):
    o_ref[...] = jnp.maximum(y_ref[...] * scale_ref[...] + shift_ref[...], 0.0)


# ---------------------------------------------------------------------------
# Tiling / VMEM accounting
# ---------------------------------------------------------------------------
def _tpu_vmem_bytes(default=64 << 20):
    try:
        return int(pltpu.get_tpu_info().vmem_capacity_bytes)
    except Exception:   # interpret mode / older runtimes: conservative default
        return default


def _est_vmem_bytes(toh, *, stride, hq, ow, kwc, kh, oc, oc_pad):
    """Rough per-step VMEM use: double-buffered pipeline blocks + scratch/temps."""
    tm = toh * ow
    x_blk = stride * hq * _round_up(ow, 16) * _round_up(kwc, 128) * 2   # bf16 image block
    w_blk = kh * _round_up(kwc, 16) * oc_pad * 2                        # bf16 weights
    y_blk = _round_up(oc, 8) * _round_up(tm, 128) * 4                   # f32 conv tile out
    st_blk = 2 * 8 * oc_pad * 4                                         # stats tiles
    acc = _round_up(tm, 8) * oc_pad * 4                                 # f32 scratch
    tmp = _round_up(tm, 8) * _round_up(kwc, 128) * 2 \
        + oc_pad * _round_up(tm, 128) * 4                               # slab + transpose temps
    return 2 * (x_blk + w_blk + y_blk + st_blk) + acc + tmp


def _pick_toh(oh, ow, est_fn, budget):
    """Largest divisor of OH whose tile is lane-legal ((toh*ow) % 128 == 0 or
    toh == OH) and fits the VMEM budget."""
    legal = [d for d in range(1, oh + 1)
             if oh % d == 0 and ((d * ow) % 128 == 0 or d == oh)]
    fitting = [d for d in legal if est_fn(d) <= budget]
    return max(fitting) if fitting else min(legal)


# ---------------------------------------------------------------------------
# Wrapper
# ---------------------------------------------------------------------------
@functools.partial(jax.jit, static_argnames=("stride", "padding", "eps"))
def convolution_layer(x, weight, gamma, beta, *, stride=1, padding=0, eps=1e-5):
    """x: [N,Cin,H,W], weight: [OC,Cin,KH,KW] -> [N,OC,OH,OW] float32."""
    n, cin, h, w = x.shape
    oc, _, kh, kw = weight.shape
    oh = (h + 2 * padding - kh) // stride + 1
    ow = (w + 2 * padding - kw) // stride + 1
    oc_pad = _round_up(oc, 128)
    kwc = kw * cin

    # ---- host-side layout prep (cheap XLA ops) ------------------------------
    # NCHW -> padded NHWC, bf16 for the MXU.
    xh = jnp.pad(jnp.transpose(x, (0, 2, 3, 1)).astype(jnp.bfloat16),
                 ((0, 0), (padding, padding), (padding, padding), (0, 0)))
    hp = xh.shape[1]
    # Width im2col: KW*Cin contiguous per output column; folds the W-stride.
    col = (jnp.arange(ow) * stride)[:, None] + jnp.arange(kw)[None, :]
    xw = xh[:, :, col, :].reshape(n, hp, ow, kwc)
    # Row de-interleave: fold the H-stride into a static group axis so the
    # kernel only does dense (unstrided) row slices.
    hq = -(-hp // stride)
    xw = jnp.pad(xw, ((0, 0), (0, hq * stride - hp), (0, 0), (0, 0)))
    xp = xw.reshape(n, hq, stride, ow, kwc).transpose(0, 2, 1, 3, 4)  # (N,S,Hq,OW,KW*Cin)

    # Weights: (OC,Cin,KH,KW) -> (KH, KW*Cin, OCp), lane-dense OC, bf16.
    wk = jnp.transpose(weight, (2, 3, 1, 0)).reshape(kh, kwc, oc)
    wk = jnp.pad(wk, ((0, 0), (0, 0), (0, oc_pad - oc))).astype(jnp.bfloat16)

    # ---- tiling / VMEM accounting --------------------------------------------
    vmem = _tpu_vmem_bytes()
    est = functools.partial(_est_vmem_bytes, stride=stride, hq=hq, ow=ow,
                            kwc=kwc, kh=kh, oc=oc, oc_pad=oc_pad)
    toh = _pick_toh(oh, ow, est, budget=int(vmem * 0.45))
    tm = toh * ow
    n_t = oh // toh
    vmem_limit = min(int(vmem * 0.75), 96 << 20)

    # ---- pass 1: conv GEMM + per-image BN statistics --------------------------
    conv, csum, csq = pl.pallas_call(
        functools.partial(_conv_stats_kernel, toh=toh, tm=tm, kh=kh,
                          stride=stride, oc=oc),
        out_shape=(jax.ShapeDtypeStruct((n, oc, oh * ow), jnp.float32),
                   jax.ShapeDtypeStruct((n, 1, oc_pad), jnp.float32),
                   jax.ShapeDtypeStruct((n, 1, oc_pad), jnp.float32)),
        grid=(n, n_t),
        in_specs=[
            pl.BlockSpec((None, stride, hq, ow, kwc), lambda i, t: (i, 0, 0, 0, 0)),
            pl.BlockSpec((kh, kwc, oc_pad), lambda i, t: (0, 0, 0)),
        ],
        out_specs=(
            pl.BlockSpec((None, oc, tm), lambda i, t: (i, 0, t)),
            pl.BlockSpec((None, 1, oc_pad), lambda i, t: (i, 0, 0)),
            pl.BlockSpec((None, 1, oc_pad), lambda i, t: (i, 0, 0)),
        ),
        scratch_shapes=[pltpu.VMEM((tm, oc_pad), jnp.float32)],
        compiler_params=pltpu.CompilerParams(
            dimension_semantics=("parallel", "arbitrary"),
            vmem_limit_bytes=vmem_limit),
    )(xp, wk)

    # ---- BN scale/shift precompute (tiny, in JAX) ------------------------------
    # TODO(synk): E[x^2]-E[x]^2 in f32 is cancellation-prone for huge N*OH*OW
    # with strongly nonzero mean; fine at these sizes (conv output ~zero mean).
    m_total = float(n * oh * ow)
    tot = jnp.sum(csum, axis=0)[0, :oc]
    tsq = jnp.sum(csq, axis=0)[0, :oc]
    mean = tot / m_total
    var = jnp.maximum(tsq / m_total - mean * mean, 0.0)        # biased var, as BN uses
    scale = gamma.astype(jnp.float32) * lax.rsqrt(var + eps)
    shift = beta.astype(jnp.float32) - mean * scale

    # ---- pass 2: normalize + affine + ReLU (streaming FMA) --------------------
    out = pl.pallas_call(
        _bn_relu_kernel,
        out_shape=jax.ShapeDtypeStruct((n, oc, oh * ow), jnp.float32),
        grid=(n, n_t),
        in_specs=[
            pl.BlockSpec((None, oc, tm), lambda i, t: (i, 0, t)),
            pl.BlockSpec((oc, 1), lambda i, t: (0, 0)),
            pl.BlockSpec((oc, 1), lambda i, t: (0, 0)),
        ],
        out_specs=pl.BlockSpec((None, oc, tm), lambda i, t: (i, 0, t)),
        compiler_params=pltpu.CompilerParams(
            dimension_semantics=("parallel", "parallel"),
            vmem_limit_bytes=vmem_limit),
    )(conv, scale.reshape(oc, 1), shift.reshape(oc, 1))

    # (N, OC, OH*OW) -> (N, OC, OH, OW) is a free view; no extra slice/transpose.
    return out.reshape(n, oc, oh, ow)


# ---------------------------------------------------------------------------
# Pure-JAX reference (same bf16 input quantization, f32 accumulation & BN)
# ---------------------------------------------------------------------------
def _reference(x, weight, gamma, beta, *, stride, padding, eps=1e-5):
    y = lax.conv_general_dilated(
        x.astype(jnp.bfloat16), weight.astype(jnp.bfloat16),
        (stride, stride), [(padding, padding), (padding, padding)],
        dimension_numbers=("NCHW", "OIHW", "NCHW"),
        preferred_element_type=jnp.float32)
    mean = y.mean(axis=(0, 2, 3), keepdims=True)
    var = jnp.square(y - mean).mean(axis=(0, 2, 3), keepdims=True)
    yh = (y - mean) * lax.rsqrt(var + eps)
    return jnp.maximum(yh * gamma.reshape(1, -1, 1, 1) + beta.reshape(1, -1, 1, 1), 0.0)


if __name__ == "__main__":
    # Small shapes consistent with the module: N=2, Cin=4, H=W=16, Cout=8, k=3
    N, CIN, H, W = 2, 4, 16, 16
    COUT, KSIZE = 8, 3

    key = jax.random.PRNGKey(0)
    kx, kw_, kg, kb = jax.random.split(key, 4)
    x = jax.random.normal(kx, (N, CIN, H, W), dtype=jnp.float32)
    fan_in = CIN * KSIZE * KSIZE
    weight = jax.random.uniform(kw_, (COUT, CIN, KSIZE, KSIZE), dtype=jnp.float32,
                                minval=-1.0, maxval=1.0) / jnp.sqrt(fan_in)
    gamma = 1.0 + 0.1 * jax.random.normal(kg, (COUT,), dtype=jnp.float32)
    beta = 0.1 * jax.random.normal(kb, (COUT,), dtype=jnp.float32)

    # stride=1 (MobileNet 3x3/1x1 body case) and stride=2 (the stem conv).
    for stride, pad in ((1, 1), (2, 1)):
        out = convolution_layer(x, weight, gamma, beta, stride=stride, padding=pad)
        out = jax.block_until_ready(out)
        ref = _reference(x, weight, gamma, beta, stride=stride, padding=pad)
        assert out.shape == ref.shape, (out.shape, ref.shape)
        max_err = float(jnp.max(jnp.abs(out - ref)))
        assert jnp.allclose(out, ref, atol=2e-3, rtol=2e-3), (stride, pad, max_err)

    print("KERNEL_OK")
</pallas_src>

<mosaic_0001>
module attributes {stable_mosaic.version = 11 : i64} {
  func.func @_bn_relu_kernel(%arg0: i32, %arg1: i32, %arg2: memref<1x8x256xf32, #tpu.memory_space<vmem>>, %arg3: memref<8x1xf32, #tpu.memory_space<vmem>>, %arg4: memref<8x1xf32, #tpu.memory_space<vmem>>, %arg5: memref<1x8x256xf32, #tpu.memory_space<vmem>>) attributes {dimension_semantics = [#tpu.dimension_semantics<parallel>, #tpu.dimension_semantics<parallel>], iteration_bounds = array<i64: 2, 1>, scalar_prefetch = 0 : i64, scratch_operands = 0 : i64, tpu.core_type = #tpu.core_type<tc>, window_params = [{transform_indices = @transform_0, window_bounds = array<i64: 1, 8, 256>}, {pipeline_mode = #tpu.pipeline_mode<synchronous>, transform_indices = @transform_1, window_bounds = array<i64: 8, 1>}, {pipeline_mode = #tpu.pipeline_mode<synchronous>, transform_indices = @transform_2, window_bounds = array<i64: 8, 1>}, {transform_indices = @transform_3, window_bounds = array<i64: 1, 8, 256>}]} {
    %c0 = arith.constant 0 : index
    %c0_0 = arith.constant 0 : index
    %c0_1 = arith.constant 0 : index
    %0 = vector.load %arg2[%c0, %c0_0, %c0_1] : memref<1x8x256xf32, #tpu.memory_space<vmem>>, vector<1x8x256xf32>
    %1 = vector.shape_cast %0 : vector<1x8x256xf32> to vector<8x256xf32>
    %c0_2 = arith.constant 0 : index
    %c0_3 = arith.constant 0 : index
    %2 = vector.load %arg3[%c0_2, %c0_3] : memref<8x1xf32, #tpu.memory_space<vmem>>, vector<8x1xf32>
    %3 = vector.broadcast %2 : vector<8x1xf32> to vector<8x256xf32>
    %4 = arith.mulf %1, %3 : vector<8x256xf32>
    %c0_4 = arith.constant 0 : index
    %c0_5 = arith.constant 0 : index
    %5 = vector.load %arg4[%c0_4, %c0_5] : memref<8x1xf32, #tpu.memory_space<vmem>>, vector<8x1xf32>
    %6 = vector.broadcast %5 : vector<8x1xf32> to vector<8x256xf32>
    %7 = arith.addf %4, %6 : vector<8x256xf32>
    %cst = arith.constant 0.000000e+00 : f32
    %8 = vector.broadcast %cst : f32 to vector<8x256xf32>
    %9 = arith.maximumf %7, %8 : vector<8x256xf32>
    %c0_6 = arith.constant 0 : index
    %c0_7 = arith.constant 0 : index
    %c0_8 = arith.constant 0 : index
    %10 = vector.load %arg5[%c0_6, %c0_7, %c0_8] : memref<1x8x256xf32, #tpu.memory_space<vmem>>, vector<1x8x256xf32>
    %11 = vector.shape_cast %10 : vector<1x8x256xf32> to vector<8x256xf32>
    %12 = vector.shape_cast %9 : vector<8x256xf32> to vector<1x8x256xf32>
    tpu.vector_store %arg5[%c0_6, %c0_7, %c0_8], %12 {strides = array<i32>} : memref<1x8x256xf32, #tpu.memory_space<vmem>>, vector<1x8x256xf32>,
    return
  }
  func.func @transform_0(%arg0: i32, %arg1: i32) -> (i32, i32, i32) {
    %c0_i32 = arith.constant 0 : i32
    %c0_i32_0 = arith.constant 0 : i32
    return %arg0, %c0_i32, %arg1 : i32, i32, i32
  }
  func.func @transform_1(%arg0: i32, %arg1: i32) -> (i32, i32) {
    %c0_i32 = arith.constant 0 : i32
    %c0_i32_0 = arith.constant 0 : i32
    %c0_i32_1 = arith.constant 0 : i32
    return %c0_i32, %c0_i32_0 : i32, i32
  }
  func.func @transform_2(%arg0: i32, %arg1: i32) -> (i32, i32) {
    %c0_i32 = arith.constant 0 : i32
    %c0_i32_0 = arith.constant 0 : i32
    %c0_i32_1 = arith.constant 0 : i32
    return %c0_i32, %c0_i32_0 : i32, i32
  }
  func.func @transform_3(%arg0: i32, %arg1: i32) -> (i32, i32, i32) {
    %c0_i32 = arith.constant 0 : i32
    %c0_i32_0 = arith.constant 0 : i32
    return %arg0, %c0_i32, %arg1 : i32, i32, i32
  }
}

module attributes {stable_mosaic.version = 11 : i64} {
  func.func @_conv_stats_kernel(%arg0: i32, %arg1: i32, %arg2: memref<1x1x18x16x12xbf16, #tpu.memory_space<vmem>>, %arg3: memref<3x12x128xbf16, #tpu.memory_space<vmem>>, %arg4: memref<1x8x256xf32, #tpu.memory_space<vmem>>, %arg5: memref<1x1x128xf32, #tpu.memory_space<vmem>>, %arg6: memref<1x1x128xf32, #tpu.memory_space<vmem>>, %arg7: memref<256x128xf32, #tpu.memory_space<vmem>>) attributes {dimension_semantics = [#tpu.dimension_semantics<parallel>, #tpu.dimension_semantics<arbitrary>], iteration_bounds = array<i64: 2, 1>, scalar_prefetch = 0 : i64, scratch_operands = 1 : i64, tpu.core_type = #tpu.core_type<tc>, window_params = [{transform_indices = @transform_0, window_bounds = array<i64: 1, 1, 18, 16, 12>}, {pipeline_mode = #tpu.pipeline_mode<synchronous>, transform_indices = @transform_1, window_bounds = array<i64: 3, 12, 128>}, {transform_indices = @transform_2, window_bounds = array<i64: 1, 8, 256>}, {transform_indices = @transform_3, window_bounds = array<i64: 1, 1, 128>}, {transform_indices = @transform_4, window_bounds = array<i64: 1, 1, 128>}]} {
    %c0_i32 = arith.constant 0 : i32
    %0 = arith.cmpi eq, %arg1, %c0_i32 : i32
    %1 = arith.extui %0 : i1 to i32
    %c0_i32_0 = arith.constant 0 : i32
    %2 = arith.cmpi ne, %1, %c0_i32_0 : i32
    scf.if %2 {
      %cst_51 = arith.constant 0.000000e+00 : f32
      %59 = vector.broadcast %cst_51 : f32 to vector<1x128xf32>
      %c0_52 = arith.constant 0 : index
      %c0_53 = arith.constant 0 : index
      %c0_54 = arith.constant 0 : index
      %60 = vector.load %arg5[%c0_52, %c0_53, %c0_54] : memref<1x1x128xf32, #tpu.memory_space<vmem>>, vector<1x1x128xf32>
      %61 = vector.shape_cast %60 : vector<1x1x128xf32> to vector<1x128xf32>
      %62 = vector.shape_cast %59 : vector<1x128xf32> to vector<1x1x128xf32>
      tpu.vector_store %arg5[%c0_52, %c0_53, %c0_54], %62 {strides = array<i32>} : memref<1x1x128xf32, #tpu.memory_space<vmem>>, vector<1x1x128xf32>,
      %cst_55 = arith.constant 0.000000e+00 : f32
      %63 = vector.broadcast %cst_55 : f32 to vector<1x128xf32>
      %c0_56 = arith.constant 0 : index
      %c0_57 = arith.constant 0 : index
      %c0_58 = arith.constant 0 : index
      %64 = vector.load %arg6[%c0_56, %c0_57, %c0_58] : memref<1x1x128xf32, #tpu.memory_space<vmem>>, vector<1x1x128xf32>
      %65 = vector.shape_cast %64 : vector<1x1x128xf32> to vector<1x128xf32>
      %66 = vector.shape_cast %63 : vector<1x128xf32> to vector<1x1x128xf32>
      tpu.vector_store %arg6[%c0_56, %c0_57, %c0_58], %66 {strides = array<i32>} : memref<1x1x128xf32, #tpu.memory_space<vmem>>, vector<1x1x128xf32>,
    } else {
    }
    %c16_i32 = arith.constant 16 : i32
    %3 = arith.muli %arg1, %c16_i32 : i32
    %4 = tpu.assume_multiple %3, 16 : i32
    %c0_i32_1 = arith.constant 0 : i32
    %5 = arith.addi %4, %c0_i32_1 : i32
    %c0 = arith.constant 0 : index
    %c0_2 = arith.constant 0 : index
    %6 = arith.index_cast %5 : i32 to index
    %c0_3 = arith.constant 0 : index
    %c0_4 = arith.constant 0 : index
    %7 = vector.load %arg2[%c0, %c0_2, %6, %c0_3, %c0_4] : memref<1x1x18x16x12xbf16, #tpu.memory_space<vmem>>, vector<1x1x16x16x12xbf16>
    %8 = vector.shape_cast %7 : vector<1x1x16x16x12xbf16> to vector<16x16x12xbf16>
    %9 = vector.shape_cast %8 : vector<16x16x12xbf16> to vector<256x12xbf16>
    %c0_5 = arith.constant 0 : index
    %c0_6 = arith.constant 0 : index
    %c0_7 = arith.constant 0 : index
    %10 = vector.load %arg3[%c0_5, %c0_6, %c0_7] : memref<3x12x128xbf16, #tpu.memory_space<vmem>>, vector<1x12x128xbf16>
    %11 = vector.shape_cast %10 : vector<1x12x128xbf16> to vector<12x128xbf16>
    %cst = arith.constant dense<0.000000e+00> : vector<256x128xf32>
    %12 = tpu.matmul %9, %11, %cst {dimension_numbers = #tpu.dot_dimension_numbers<[1], [0], [0], [1], [0, 0, 1, 1], [], []>} : vector<256x12xbf16>, vector<12x128xbf16>, vector<256x128xf32> -> vector<256x128xf32>
    %c0_8 = arith.constant 0 : index
    %c0_9 = arith.constant 0 : index
    %13 = vector.load %arg7[%c0_8, %c0_9] : memref<256x128xf32, #tpu.memory_space<vmem>>, vector<256x128xf32>
    tpu.vector_store %arg7[%c0_8, %c0_9], %12 {strides = array<i32>} : memref<256x128xf32, #tpu.memory_space<vmem>>, vector<256x128xf32>,
    %c1_i32 = arith.constant 1 : i32
    %14 = arith.addi %4, %c1_i32 : i32
    %c0_10 = arith.constant 0 : index
    %c0_11 = arith.constant 0 : index
    %15 = arith.index_cast %14 : i32 to index
    %c0_12 = arith.constant 0 : index
    %c0_13 = arith.constant 0 : index
    %16 = vector.load %arg2[%c0_10, %c0_11, %15, %c0_12, %c0_13] : memref<1x1x18x16x12xbf16, #tpu.memory_space<vmem>>, vector<1x1x16x16x12xbf16>
    %17 = vector.shape_cast %16 : vector<1x1x16x16x12xbf16> to vector<16x16x12xbf16>
    %18 = vector.shape_cast %17 : vector<16x16x12xbf16> to vector<256x12xbf16>
    %c1 = arith.constant 1 : index
    %c0_14 = arith.constant 0 : index
    %c0_15 = arith.constant 0 : index
    %19 = vector.load %arg3[%c1, %c0_14, %c0_15] : memref<3x12x128xbf16, #tpu.memory_space<vmem>>, vector<1x12x128xbf16>
    %20 = vector.shape_cast %19 : vector<1x12x128xbf16> to vector<12x128xbf16>
    %cst_16 = arith.constant dense<0.000000e+00> : vector<256x128xf32>
    %21 = tpu.matmul %18, %20, %cst_16 {dimension_numbers = #tpu.dot_dimension_numbers<[1], [0], [0], [1], [0, 0, 1, 1], [], []>} : vector<256x12xbf16>, vector<12x128xbf16>, vector<256x128xf32> -> vector<256x128xf32>
    %c0_17 = arith.constant 0 : index
    %c0_18 = arith.constant 0 : index
    %22 = vector.load %arg7[%c0_17, %c0_18] : memref<256x128xf32, #tpu.memory_space<vmem>>, vector<256x128xf32>
    %23 = arith.addf %22, %21 : vector<256x128xf32>
    %c0_19 = arith.constant 0 : index
    %c0_20 = arith.constant 0 : index
    %24 = vector.load %arg7[%c0_19, %c0_20] : memref<256x128xf32, #tpu.memory_space<vmem>>, vector<256x128xf32>
    tpu.vector_store %arg7[%c0_19, %c0_20], %23 {strides = array<i32>} : memref<256x128xf32, #tpu.memory_space<vmem>>, vector<256x128xf32>,
    %c2_i32 = arith.constant 2 : i32
    %25 = arith.addi %4, %c2_i32 : i32
    %c0_21 = arith.constant 0 : index
    %c0_22 = arith.constant 0 : index
    %26 = arith.index_cast %25 : i32 to index
    %c0_23 = arith.constant 0 : index
    %c0_24 = arith.constant 0 : index
    %27 = vector.load %arg2[%c0_21, %c0_22, %26, %c0_23, %c0_24] : memref<1x1x18x16x12xbf16, #tpu.memory_space<vmem>>, vector<1x1x16x16x12xbf16>
    %28 = vector.shape_cast %27 : vector<1x1x16x16x12xbf16> to vector<16x16x12xbf16>
    %29 = vector.shape_cast %28 : vector<16x16x12xbf16> to vector<256x12xbf16>
    %c2 = arith.constant 2 : index
    %c0_25 = arith.constant 0 : index
    %c0_26 = arith.constant 0 : index
    %30 = vector.load %arg3[%c2, %c0_25, %c0_26] : memref<3x12x128xbf16, #tpu.memory_space<vmem>>, vector<1x12x128xbf16>
    %31 = vector.shape_cast %30 : vector<1x12x128xbf16> to vector<12x128xbf16>
    %cst_27 = arith.constant dense<0.000000e+00> : vector<256x128xf32>
    %32 = tpu.matmul %29, %31, %cst_27 {dimension_numbers = #tpu.dot_dimension_numbers<[1], [0], [0], [1], [0, 0, 1, 1], [], []>} : vector<256x12xbf16>, vector<12x128xbf16>, vector<256x128xf32> -> vector<256x128xf32>
    %c0_28 = arith.constant 0 : index
    %c0_29 = arith.constant 0 : index
    %33 = vector.load %arg7[%c0_28, %c0_29] : memref<256x128xf32, #tpu.memory_space<vmem>>, vector<256x128xf32>
    %34 = arith.addf %33, %32 : vector<256x128xf32>
    %c0_30 = arith.constant 0 : index
    %c0_31 = arith.constant 0 : index
    %35 = vector.load %arg7[%c0_30, %c0_31] : memref<256x128xf32, #tpu.memory_space<vmem>>, vector<256x128xf32>
    tpu.vector_store %arg7[%c0_30, %c0_31], %34 {strides = array<i32>} : memref<256x128xf32, #tpu.memory_space<vmem>>, vector<256x128xf32>,
    %c0_32 = arith.constant 0 : index
    %c0_33 = arith.constant 0 : index
    %36 = vector.load %arg7[%c0_32, %c0_33] : memref<256x128xf32, #tpu.memory_space<vmem>>, vector<256x128xf32>
    %c0_34 = arith.constant 0 : index
    %c0_35 = arith.constant 0 : index
    %c0_36 = arith.constant 0 : index
    %37 = vector.load %arg5[%c0_34, %c0_35, %c0_36] : memref<1x1x128xf32, #tpu.memory_space<vmem>>, vector<1x1x128xf32>
    %38 = vector.shape_cast %37 : vector<1x1x128xf32> to vector<1x128xf32>
    %cst_37 = arith.constant dense<0.000000e+00> : vector<128xf32>
    %39 = vector.multi_reduction <add>, %36, %cst_37 [0] : vector<256x128xf32> to vector<128xf32>
    %40 = vector.shape_cast %39 : vector<128xf32> to vector<1x128xf32>
    %41 = arith.addf %38, %40 : vector<1x128xf32>
    %c0_38 = arith.constant 0 : index
    %c0_39 = arith.constant 0 : index
    %c0_40 = arith.constant 0 : index
    %42 = vector.load %arg5[%c0_38, %c0_39, %c0_40] : memref<1x1x128xf32, #tpu.memory_space<vmem>>, vector<1x1x128xf32>
    %43 = vector.shape_cast %42 : vector<1x1x128xf32> to vector<1x128xf32>
    %44 = vector.shape_cast %41 : vector<1x128xf32> to vector<1x1x128xf32>
    tpu.vector_store %arg5[%c0_38, %c0_39, %c0_40], %44 {strides = array<i32>} : memref<1x1x128xf32, #tpu.memory_space<vmem>>, vector<1x1x128xf32>,
    %c0_41 = arith.constant 0 : index
    %c0_42 = arith.constant 0 : index
    %c0_43 = arith.constant 0 : index
    %45 = vector.load %arg6[%c0_41, %c0_42, %c0_43] : memref<1x1x128xf32, #tpu.memory_space<vmem>>, vector<1x1x128xf32>
    %46 = vector.shape_cast %45 : vector<1x1x128xf32> to vector<1x128xf32>
    %47 = arith.mulf %36, %36 : vector<256x128xf32>
    %cst_44 = arith.constant dense<0.000000e+00> : vector<128xf32>
    %48 = vector.multi_reduction <add>, %47, %cst_44 [0] : vector<256x128xf32> to vector<128xf32>
    %49 = vector.shape_cast %48 : vector<128xf32> to vector<1x128xf32>
    %50 = arith.addf %46, %49 : vector<1x128xf32>
    %c0_45 = arith.constant 0 : index
    %c0_46 = arith.constant 0 : index
    %c0_47 = arith.constant 0 : index
    %51 = vector.load %arg6[%c0_45, %c0_46, %c0_47] : memref<1x1x128xf32, #tpu.memory_space<vmem>>, vector<1x1x128xf32>
    %52 = vector.shape_cast %51 : vector<1x1x128xf32> to vector<1x128xf32>
    %53 = vector.shape_cast %50 : vector<1x128xf32> to vector<1x1x128xf32>
    tpu.vector_store %arg6[%c0_45, %c0_46, %c0_47], %53 {strides = array<i32>} : memref<1x1x128xf32, #tpu.memory_space<vmem>>, vector<1x1x128xf32>,
    %54 = tpu.transpose %36, [1, 0] : vector<256x128xf32> -> vector<128x256xf32>
    %55 = vector.extract_strided_slice %54 {offsets = [0, 0], sizes = [8, 256], strides = [1, 1]} : vector<128x256xf32> to vector<8x256xf32>
    %c0_48 = arith.constant 0 : index
    %c0_49 = arith.constant 0 : index
    %c0_50 = arith.constant 0 : index
    %56 = vector.load %arg4[%c0_48, %c0_49, %c0_50] : memref<1x8x256xf32, #tpu.memory_space<vmem>>, vector<1x8x256xf32>
    %57 = vector.shape_cast %56 : vector<1x8x256xf32> to vector<8x256xf32>
    %58 = vector.shape_cast %55 : vector<8x256xf32> to vector<1x8x256xf32>
    tpu.vector_store %arg4[%c0_48, %c0_49, %c0_50], %58 {strides = array<i32>} : memref<1x8x256xf32, #tpu.memory_space<vmem>>, vector<1x8x256xf32>,
    return
  }
  func.func @transform_0(%arg0: i32, %arg1: i32) -> (i32, i32, i32, i32, i32) {
    %c0_i32 = arith.constant 0 : i32
    %c0_i32_0 = arith.constant 0 : i32
    %c0_i32_1 = arith.constant 0 : i32
    %c0_i32_2 = arith.constant 0 : i32
    %c0_i32_3 = arith.constant 0 : i32
    return %arg0, %c0_i32, %c0_i32_0, %c0_i32_1, %c0_i32_2 : i32, i32, i32, i32, i32
  }
  func.func @transform_1(%arg0: i32, %arg1: i32) -> (i32, i32, i32) {
    %c0_i32 = arith.constant 0 : i32
    %c0_i32_0 = arith.constant 0 : i32
    %c0_i32_1 = arith.constant 0 : i32
    %c0_i32_2 = arith.constant 0 : i32
    return %c0_i32, %c0_i32_0, %c0_i32_1 : i32, i32, i32
  }
  func.func @transform_2(%arg0: i32, %arg1: i32) -> (i32, i32, i32) {
    %c0_i32 = arith.constant 0 : i32
    %c0_i32_0 = arith.constant 0 : i32
    return %arg0, %c0_i32, %arg1 : i32, i32, i32
  }
  func.func @transform_3(%arg0: i32, %arg1: i32) -> (i32, i32, i32) {
    %c0_i32 = arith.constant 0 : i32
    %c0_i32_0 = arith.constant 0 : i32
    %c0_i32_1 = arith.constant 0 : i32
    return %arg0, %c0_i32, %c0_i32_0 : i32, i32, i32
  }
  func.func @transform_4(%arg0: i32, %arg1: i32) -> (i32, i32, i32) {
    %c0_i32 = arith.constant 0 : i32
    %c0_i32_0 = arith.constant 0 : i32
    %c0_i32_1 = arith.constant 0 : i32
    return %arg0, %c0_i32, %c0_i32_0 : i32, i32, i32
  }
}

</mosaic_0001>

<llo_original>
// kernel: convolution_layer.3
$region0: #{convolution_layer.3}
  #allocation0 [shape = 'u32[]', space=smem, size = 0x4, offset = 0x4, fixed_abs, tag = 'smem constant byte address 0x4 - core index']
  #allocation1 [shape = 'u32[72,128]{1,0:T(1,128)}', space=vmem, size = 0x9000, scoped, tag = 'internal scratch']
  %s0 = inlined_call_operand.vmem [shape: f32[2,8,256], index: 0, kind: input, shape index: {}]
  %s1 = inlined_call_operand.vmem [shape: f32[8,1], index: 1, kind: input, shape index: {}]
  %s2 = inlined_call_operand.vmem [shape: f32[8,1], index: 2, kind: input, shape index: {}]
  %s3 = inlined_call_operand.vmem [shape: f32[2,8,256], index: 3, kind: output, shape index: {}]
  %s4 = sld [smem:[#allocation0]]
  $region45: #{convolution_layer.3} parent=0
    _
  %s6 = ssub.s32 1, %s4
  %s7 = scalar_select 0, %s6, %s4
  loop: start=0, step=1, limit=4
  $region2: #{convolution_layer.3} parent=0 // loop_pre_header
    _
  $region3: #{convolution_layer.3} parent=0 // loop_header
    %s9 = sphi 0, %s13
    %p10 = scmp.ge.s32.totalorder %s9, 4
    %s16 = sphi 0, %s28
    %s17 = sphi 0, %s24
    %s18 = sphi 0, %s16
    %s19 = sphi 0, %s17
    %s20 = sphi 0, %s18
    %s21 = sphi 0, %s19
    %s33 = sphi 0, %s35
    %s36 = sphi 0, %s33
    %s37 = sphi 0, %s36
    %s53 = sphi 0, %s37
    %s57 = sphi 0, %s57
    %s59 = sphi 0, %s57
    %s60 = sphi 0, %s59
    %s74 = sphi 0, %s60
    %s78 = sphi 0, %s78
    %s80 = sphi 0, %s78
    %s81 = sphi 0, %s80
    %s95 = sphi 0, %s81
    %s103 = sphi 0, %s105
    %s106 = sphi 0, %s103
    %s107 = sphi 0, %s106
    %s123 = sphi 0, %s107
  $region4: #{convolution_layer.3} parent=0 // loop_header_branch
    %12 = sbr.rel (%p10) target = $region8
  $region5: #{convolution_layer.3} parent=0 // loop_body
    %s14 = ssub.s32 %s9, 1
    %s15 = ssub.s32 %s9, 2
    %s22 = sadd.s32 1, %s17
    %p23 = scmp.ge.s32.totalorder %s22, 1
    %s24 = scalar_select %p23, 0, %s22
    %s25 = sadd.s32 1, %s16
    %s26 = scalar_select %p23, %s25, %s16
    %p27 = scmp.ge.s32.totalorder %s26, 2
    %s28 = scalar_select %p27, 0, %s26
    %s29 = ssub.s32 %s16, %s28
    %s30 = ssub.s32 %s17, %s24
    %s31 = sor.u32 %s29, %s30
    %p32 = scmp.eq.s32.totalorder %s31, 0
    %s34 = sadd.s32 %s33, 1
    %s35 = scalar_select %p32, %s33, %s34
    %p38 = pneg %p32
    %p39 = scmp.eq.s32.totalorder %s9, 1
    %p40 = por %p38, %p39
    %p41 = scmp.ne.s32.totalorder %s33, %s36
    %p42 = scmp.eq.s32.totalorder %s9, 0
    %p43 = por %p41, %p42
    %p44 = scmp.ne.s32.totalorder %s33, %s36
    %p45 = scmp.eq.s32.totalorder %s14, 1
    %p46 = por %p44, %p45
    %p47 = scmp.ne.s32.totalorder %s36, %s37
    %p48 = scmp.eq.s32.totalorder %s14, 0
    %p49 = por %p47, %p48
    %p50 = scmp.ne.s32.totalorder %s36, %s37
    %p51 = scmp.eq.s32.totalorder %s15, 1
    %p52 = por %p50, %p51
    %p54 = scmp.ne.s32.totalorder %s37, %s53
    %p55 = scmp.eq.s32.totalorder %s15, 0
    %p56 = por %p54, %p55
    %s58 = sadd.s32 %s57, 1
    %p61 = scmp.eq.s32.totalorder %s9, 1
    %p62 = scmp.ne.s32.totalorder %s57, %s59
    %p63 = scmp.eq.s32.totalorder %s9, 0
    %p64 = por %p62, %p63
    %p65 = scmp.ne.s32.totalorder %s57, %s59
    %p66 = scmp.eq.s32.totalorder %s14, 1
    %p67 = por %p65, %p66
    %p68 = scmp.ne.s32.totalorder %s59, %s60
    %p69 = scmp.eq.s32.totalorder %s14, 0
    %p70 = por %p68, %p69
    %p71 = scmp.ne.s32.totalorder %s59, %s60
    %p72 = scmp.eq.s32.totalorder %s15, 1
    %p73 = por %p71, %p72
    %p75 = scmp.ne.s32.totalorder %s60, %s74
    %p76 = scmp.eq.s32.totalorder %s15, 0
    %p77 = por %p75, %p76
    %s79 = sadd.s32 %s78, 1
    %p82 = scmp.eq.s32.totalorder %s9, 1
    %p83 = scmp.ne.s32.totalorder %s78, %s80
    %p84 = scmp.eq.s32.totalorder %s9, 0
    %p85 = por %p83, %p84
    %p86 = scmp.ne.s32.totalorder %s78, %s80
    %p87 = scmp.eq.s32.totalorder %s14, 1
    %p88 = por %p86, %p87
    %p89 = scmp.ne.s32.totalorder %s80, %s81
    %p90 = scmp.eq.s32.totalorder %s14, 0
    %p91 = por %p89, %p90
    %p92 = scmp.ne.s32.totalorder %s80, %s81
    %p93 = scmp.eq.s32.totalorder %s15, 1
    %p94 = por %p92, %p93
    %p96 = scmp.ne.s32.totalorder %s81, %s95
    %p97 = scmp.eq.s32.totalorder %s15, 0
    %p98 = por %p96, %p97
    %s99 = ssub.s32 %s16, %s28
    %s100 = ssub.s32 %s17, %s24
    %s101 = sor.u32 %s99, %s100
    %p102 = scmp.eq.s32.totalorder %s101, 0
    %s104 = sadd.s32 %s103, 1
    %s105 = scalar_select %p102, %s103, %s104
    %p108 = pneg %p102
    %p109 = scmp.eq.s32.totalorder %s9, 1
    %p110 = por %p108, %p109
    %p111 = scmp.ne.s32.totalorder %s103, %s106
    %p112 = scmp.eq.s32.totalorder %s9, 0
    %p113 = por %p111, %p112
    %p114 = scmp.ne.s32.totalorder %s103, %s106
    %p115 = scmp.eq.s32.totalorder %s14, 1
    %p116 = por %p114, %p115
    %p117 = scmp.ne.s32.totalorder %s106, %s107
    %p118 = scmp.eq.s32.totalorder %s14, 0
    %p119 = por %p117, %p118
    %p120 = scmp.ne.s32.totalorder %s106, %s107
    %p121 = scmp.eq.s32.totalorder %s15, 1
    %p122 = por %p120, %p121
    %p124 = scmp.ne.s32.totalorder %s107, %s123
    %p125 = scmp.eq.s32.totalorder %s15, 0
    %p126 = por %p124, %p125
    %p127 = scmp.le.s32.totalorder 1, %s9
    %p128 = scmp.lt.s32.totalorder %s9, 3
    %p129 = pnand %p127, %p128
    %p130 = pneg %p129
    // Predicated region
    $region9: #{convolution_layer.3} parent=5 // pred_check
      _
    $region10: #{convolution_layer.3} parent=5 // pred_check_branch
      %132 = sbr.rel (%p129) target = $region12
    $region11: #{convolution_layer.3} parent=5 // pred_region
      %s133 = ssub.s32 %s9, 1
      // Predicated region
      $region13: #{convolution_layer.3} parent=11 // pred_check
        %p134 = pneg %p70
      $region14: #{convolution_layer.3} parent=11 // pred_check_branch
        %136 = sbr.rel (%p134) target = $region16
      $region15: #{convolution_layer.3} parent=11 // pred_region
        _
      $region16: #{convolution_layer.3} parent=11 // pred_fallthru
        _
      // Predicated region
      $region17: #{convolution_layer.3} parent=11 // pred_check
        %p137 = pneg %p91
      $region18: #{convolution_layer.3} parent=11 // pred_check_branch
        %139 = sbr.rel (%p137) target = $region20
      $region19: #{convolution_layer.3} parent=11 // pred_region
        _
      $region20: #{convolution_layer.3} parent=11 // pred_fallthru
        _
    $region12: #{convolution_layer.3} parent=5 // pred_fallthru
      _
    %p140 = scmp.lt.s32.totalorder %s9, 2
    // Predicated region
    $region21: #{convolution_layer.3} parent=5 // pred_check
      %p141 = pneg %p140
    $region22: #{convolution_layer.3} parent=5 // pred_check_branch
      %143 = sbr.rel (%p141) target = $region24
    $region23: #{convolution_layer.3} parent=5 // pred_region
      // Predicated region
      $region25: #{convolution_layer.3} parent=23 // pred_check
        %p144 = pneg %p43
      $region26: #{convolution_layer.3} parent=23 // pred_check_branch
        %146 = sbr.rel (%p144) target = $region28
      $region27: #{convolution_layer.3} parent=23 // pred_region
        %s147 = smul.u32 2, %s17
        %p148 = scmp.lt.s32.totalorder %s16, 1
        %s149 = scalar_select %p148, %s16, 1
        %p150 = scmp.lt.s32.totalorder %s147, 1
        %s151 = scalar_select %p150, %s147, 1
        %s152 = smul.addr %s149, 2
        %s153 = sadd.s32 %s151, %s152
        %s154 = smul.addr %s153, 8
        %s155 = scalar_lea.vmem %s0, %s154
        %s156 = smul.u32 2, %s17
      $region28: #{convolution_layer.3} parent=23 // pred_fallthru
        _
    $region24: #{convolution_layer.3} parent=5 // pred_fallthru
      _
    %p157 = scmp.le.s32.totalorder 1, %s9
    %p158 = scmp.lt.s32.totalorder %s9, 3
    %p159 = pnand %p157, %p158
    %p160 = pneg %p159
    // Predicated region
    $region29: #{convolution_layer.3} parent=5 // pred_check
      _
    $region30: #{convolution_layer.3} parent=5 // pred_check_branch
      %162 = sbr.rel (%p159) target = $region32
    $region31: #{convolution_layer.3} parent=5 // pred_region
      %s163 = ssub.s32 %s9, 1
      %s164 = smul.u32 2, %s19
      %p165 = scmp.lt.s32.totalorder %s18, 1
      %s166 = scalar_select %p165, %s18, 1
      %p167 = scmp.lt.s32.totalorder %s164, 1
      %s168 = scalar_select %p167, %s164, 1
      %s169 = smul.addr %s166, 2
      %s170 = sadd.s32 %s168, %s169
      %s171 = smul.addr %s170, 8
      %s172 = scalar_lea.vmem %s0, %s171
      %p173 = pneg %p49
      %p174 = pneg %p46
      %p175 = pneg %p70
      %p176 = pneg %p67
      %p177 = pneg %p91
      %p178 = pneg %p88
      %p179 = pneg %p119
      %p180 = pneg %p116
      %s181 = smul.u32 2, %s19
      %p182 = scmp.lt.s32.totalorder %s18, 1
      %s183 = scalar_select %p182, %s18, 1
      %p184 = scmp.lt.s32.totalorder %s181, 1
      %s185 = scalar_select %p184, %s181, 1
      %s186 = smul.addr %s183, 2
      %s187 = sadd.s32 %s185, %s186
      %s188 = smul.addr %s187, 8
      %s189 = scalar_lea.vmem %s3, %s188
      %s190 = smul.u32 2, %s19
      %p191 = scmp.lt.s32.totalorder %s18, 1
      %s192 = scalar_select %p191, %s18, 1
      %p193 = scmp.lt.s32.totalorder %s190, 1
      %s194 = scalar_select %p193, %s190, 1
      %s195 = smul.addr %s192, 2
      %s196 = sadd.s32 %s194, %s195
      %s197 = smul.addr %s196, 8
      %s198 = scalar_lea.vmem %s0, %s197
      %s199 = smul.u32 2, %s19
      %s200 = smul.u32 2, %s19
      %p201 = scmp.lt.s32.totalorder %s18, 1
      %s202 = scalar_select %p201, %s18, 1
      %p203 = scmp.lt.s32.totalorder %s200, 1
      %s204 = scalar_select %p203, %s200, 1
      %s205 = smul.addr %s202, 2
      %s206 = sadd.s32 %s204, %s205
      %s207 = smul.addr %s206, 8
      %s208 = scalar_lea.vmem %s3, %s207
      %s209 = smul.u32 2, %s19
      %v210 = vld [vmem:[%s198] sm:$0xff]
      %v211 = vld [vmem:[%s198 + $0x8] sm:$0xff]
      %v212 = vld [vmem:[%s1] sm:$0xff]
      %214 = vset.pattern.permute.xlu0 0
      %215 = vperm.xlu0 %214, %v212
      %v216 = vpop.permute.xlu0 %215
      %v218 = vmul.f32 %v210, %v216
      %v219 = vmul.f32 %v211, %v216
      %v220 = vld [vmem:[%s2] sm:$0xff]
      %222 = vset.pattern.permute.xlu0 0
      %223 = vperm.xlu0 %222, %v220
      %v224 = vpop.permute.xlu0 %223
      %v226 = vadd.f32 %v218, %v224
      %v227 = vadd.f32 %v219, %v224
      %v228 = vmax.f32 %v226, 0.0
      %v229 = vmax.f32 %v227, 0.0
      %230 = vst [vmem:[%s208] sm:$0xff] %v228
      %231 = vst [vmem:[%s208 + $0x8] sm:$0xff] %v229
      %s232 = smul.u32 2, %s19
      %p233 = scmp.lt.s32.totalorder %s18, 1
      %s234 = scalar_select %p233, %s18, 1
      %p235 = scmp.lt.s32.totalorder %s232, 1
      %s236 = scalar_select %p235, %s232, 1
      %s237 = smul.addr %s234, 2
      %s238 = sadd.s32 %s236, %s237
      %s239 = smul.addr %s238, 8
      %s240 = scalar_lea.vmem %s3, %s239
      // Predicated region
      $region33: #{convolution_layer.3} parent=31 // pred_check
        %p241 = pneg %p116
      $region34: #{convolution_layer.3} parent=31 // pred_check_branch
        %243 = sbr.rel (%p241) target = $region36
      $region35: #{convolution_layer.3} parent=31 // pred_region
        %s244 = smul.u32 2, %s19
      $region36: #{convolution_layer.3} parent=31 // pred_fallthru
        _
    $region32: #{convolution_layer.3} parent=5 // pred_fallthru
      _
    %p245 = scmp.le.s32.totalorder 2, %s9
    // Predicated region
    $region37: #{convolution_layer.3} parent=5 // pred_check
      %p246 = pneg %p245
    $region38: #{convolution_layer.3} parent=5 // pred_check_branch
      %248 = sbr.rel (%p246) target = $region40
    $region39: #{convolution_layer.3} parent=5 // pred_region
      %s249 = ssub.s32 %s9, 2
      // Predicated region
      $region41: #{convolution_layer.3} parent=39 // pred_check
        %p250 = pneg %p122
      $region42: #{convolution_layer.3} parent=39 // pred_check_branch
        %252 = sbr.rel (%p250) target = $region44
      $region43: #{convolution_layer.3} parent=39 // pred_region
        %s253 = smul.u32 2, %s21
        %p254 = scmp.lt.s32.totalorder %s20, 1
        %s255 = scalar_select %p254, %s20, 1
        %p256 = scmp.lt.s32.totalorder %s253, 1
        %s257 = scalar_select %p256, %s253, 1
        %s258 = smul.addr %s255, 2
        %s259 = sadd.s32 %s257, %s258
        %s260 = smul.addr %s259, 8
        %s261 = scalar_lea.vmem %s3, %s260
      $region44: #{convolution_layer.3} parent=39 // pred_fallthru
        _
    $region40: #{convolution_layer.3} parent=5 // pred_fallthru
      _
  $region6: #{convolution_layer.3} parent=0 // loop_footer
    %s13 = sadd.s32 1, %s9
  $region7: #{convolution_layer.3} parent=0 // loop_footer_branch
    %8 = sbr.rel target = $region3
  $region8: #{convolution_layer.3} parent=0 // loop_exit
    _

// kernel: convolution_layer.2
$region0: #{convolution_layer.2}
  #allocation0 [shape = 'u32[]', space=smem, size = 0x4, offset = 0x4, fixed_abs, tag = 'smem constant byte address 0x4 - core index']
  #allocation1 [shape = 'u32[72,128]{1,0:T(1,128)}', space=vmem, size = 0x9000, scoped, tag = 'internal scratch']
  #allocation2 [shape = 'f32[256,128]{1,0:T(8,128)}', space=vmem, size = 0x20000, scoped, tag = 'scratch operand']
  %s0 = inlined_call_operand.vmem [shape: bf16[2,1,18,16,12], index: 0, kind: input, shape index: {}]
  %s1 = inlined_call_operand.vmem [shape: bf16[3,12,128], index: 1, kind: input, shape index: {}]
  %s2 = inlined_call_operand.vmem [shape: f32[2,8,256], index: 2, kind: output, shape index: {0}]
  %s3 = inlined_call_operand.vmem [shape: f32[2,1,128], index: 3, kind: output, shape index: {1}]
  %s4 = inlined_call_operand.vmem [shape: f32[2,1,128], index: 4, kind: output, shape index: {2}]
  %5 = xla_tuple %s2, %s3, %s4
  %s6 = sld [smem:[#allocation0]]
  $region61: #{convolution_layer.2} parent=0
    _
  %s8 = ssub.s32 1, %s6
  %s9 = scalar_select 0, %s8, %s6
  loop: start=0, step=1, limit=4
  $region2: #{convolution_layer.2} parent=0 // loop_pre_header
    _
  $region3: #{convolution_layer.2} parent=0 // loop_header
    %s11 = sphi 0, %s15
    %p12 = scmp.ge.s32.totalorder %s11, 4
    %s18 = sphi 0, %s30
    %s19 = sphi 0, %s26
    %s20 = sphi 0, %s18
    %s21 = sphi 0, %s19
    %s22 = sphi 0, %s20
    %s23 = sphi 0, %s21
    %s33 = sphi 0, %s35
    %s36 = sphi 0, %s33
    %s37 = sphi 0, %s36
    %s53 = sphi 0, %s37
    %s57 = sphi 0, %s57
    %s59 = sphi 0, %s57
    %s60 = sphi 0, %s59
    %s74 = sphi 0, %s60
    %s82 = sphi 0, %s84
    %s85 = sphi 0, %s82
    %s86 = sphi 0, %s85
    %s102 = sphi 0, %s86
    %s108 = sphi 0, %s110
    %s111 = sphi 0, %s108
    %s112 = sphi 0, %s111
    %s128 = sphi 0, %s112
    %s134 = sphi 0, %s136
    %s137 = sphi 0, %s134
    %s138 = sphi 0, %s137
    %s154 = sphi 0, %s138
  $region4: #{convolution_layer.2} parent=0 // loop_header_branch
    %14 = sbr.rel (%p12) target = $region8
  $region5: #{convolution_layer.2} parent=0 // loop_body
    %s16 = ssub.s32 %s11, 1
    %s17 = ssub.s32 %s11, 2
    %s24 = sadd.s32 1, %s19
    %p25 = scmp.ge.s32.totalorder %s24, 1
    %s26 = scalar_select %p25, 0, %s24
    %s27 = sadd.s32 1, %s18
    %s28 = scalar_select %p25, %s27, %s18
    %p29 = scmp.ge.s32.totalorder %s28, 2
    %s30 = scalar_select %p29, 0, %s28
    %s31 = ssub.s32 %s18, %s30
    %p32 = scmp.eq.s32.totalorder %s31, 0
    %s34 = sadd.s32 %s33, 1
    %s35 = scalar_select %p32, %s33, %s34
    %p38 = pneg %p32
    %p39 = scmp.eq.s32.totalorder %s11, 1
    %p40 = por %p38, %p39
    %p41 = scmp.ne.s32.totalorder %s33, %s36
    %p42 = scmp.eq.s32.totalorder %s11, 0
    %p43 = por %p41, %p42
    %p44 = scmp.ne.s32.totalorder %s33, %s36
    %p45 = scmp.eq.s32.totalorder %s16, 1
    %p46 = por %p44, %p45
    %p47 = scmp.ne.s32.totalorder %s36, %s37
    %p48 = scmp.eq.s32.totalorder %s16, 0
    %p49 = por %p47, %p48
    %p50 = scmp.ne.s32.totalorder %s36, %s37
    %p51 = scmp.eq.s32.totalorder %s17, 1
    %p52 = por %p50, %p51
    %p54 = scmp.ne.s32.totalorder %s37, %s53
    %p55 = scmp.eq.s32.totalorder %s17, 0
    %p56 = por %p54, %p55
    %s58 = sadd.s32 %s57, 1
    %p61 = scmp.eq.s32.totalorder %s11, 1
    %p62 = scmp.ne.s32.totalorder %s57, %s59
    %p63 = scmp.eq.s32.totalorder %s11, 0
    %p64 = por %p62, %p63
    %p65 = scmp.ne.s32.totalorder %s57, %s59
    %p66 = scmp.eq.s32.totalorder %s16, 1
    %p67 = por %p65, %p66
    %p68 = scmp.ne.s32.totalorder %s59, %s60
    %p69 = scmp.eq.s32.totalorder %s16, 0
    %p70 = por %p68, %p69
    %p71 = scmp.ne.s32.totalorder %s59, %s60
    %p72 = scmp.eq.s32.totalorder %s17, 1
    %p73 = por %p71, %p72
    %p75 = scmp.ne.s32.totalorder %s60, %s74
    %p76 = scmp.eq.s32.totalorder %s17, 0
    %p77 = por %p75, %p76
    %s78 = ssub.s32 %s18, %s30
    %s79 = ssub.s32 %s19, %s26
    %s80 = sor.u32 %s78, %s79
    %p81 = scmp.eq.s32.totalorder %s80, 0
    %s83 = sadd.s32 %s82, 1
    %s84 = scalar_select %p81, %s82, %s83
    %p87 = pneg %p81
    %p88 = scmp.eq.s32.totalorder %s11, 1
    %p89 = por %p87, %p88
    %p90 = scmp.ne.s32.totalorder %s82, %s85
    %p91 = scmp.eq.s32.totalorder %s11, 0
    %p92 = por %p90, %p91
    %p93 = scmp.ne.s32.totalorder %s82, %s85
    %p94 = scmp.eq.s32.totalorder %s16, 1
    %p95 = por %p93, %p94
    %p96 = scmp.ne.s32.totalorder %s85, %s86
    %p97 = scmp.eq.s32.totalorder %s16, 0
    %p98 = por %p96, %p97
    %p99 = scmp.ne.s32.totalorder %s85, %s86
    %p100 = scmp.eq.s32.totalorder %s17, 1
    %p101 = por %p99, %p100
    %p103 = scmp.ne.s32.totalorder %s86, %s102
    %p104 = scmp.eq.s32.totalorder %s17, 0
    %p105 = por %p103, %p104
    %s106 = ssub.s32 %s18, %s30
    %p107 = scmp.eq.s32.totalorder %s106, 0
    %s109 = sadd.s32 %s108, 1
    %s110 = scalar_select %p107, %s108, %s109
    %p113 = pneg %p107
    %p114 = scmp.eq.s32.totalorder %s11, 1
    %p115 = por %p113, %p114
    %p116 = scmp.ne.s32.totalorder %s108, %s111
    %p117 = scmp.eq.s32.totalorder %s11, 0
    %p118 = por %p116, %p117
    %p119 = scmp.ne.s32.totalorder %s108, %s111
    %p120 = scmp.eq.s32.totalorder %s16, 1
    %p121 = por %p119, %p120
    %p122 = scmp.ne.s32.totalorder %s111, %s112
    %p123 = scmp.eq.s32.totalorder %s16, 0
    %p124 = por %p122, %p123
    %p125 = scmp.ne.s32.totalorder %s111, %s112
    %p126 = scmp.eq.s32.totalorder %s17, 1
    %p127 = por %p125, %p126
    %p129 = scmp.ne.s32.totalorder %s112, %s128
    %p130 = scmp.eq.s32.totalorder %s17, 0
    %p131 = por %p129, %p130
    %s132 = ssub.s32 %s18, %s30
    %p133 = scmp.eq.s32.totalorder %s132, 0
    %s135 = sadd.s32 %s134, 1
    %s136 = scalar_select %p133, %s134, %s135
    %p139 = pneg %p133
    %p140 = scmp.eq.s32.totalorder %s11, 1
    %p141 = por %p139, %p140
    %p142 = scmp.ne.s32.totalorder %s134, %s137
    %p143 = scmp.eq.s32.totalorder %s11, 0
    %p144 = por %p142, %p143
    %p145 = scmp.ne.s32.totalorder %s134, %s137
    %p146 = scmp.eq.s32.totalorder %s16, 1
    %p147 = por %p145, %p146
    %p148 = scmp.ne.s32.totalorder %s137, %s138
    %p149 = scmp.eq.s32.totalorder %s16, 0
    %p150 = por %p148, %p149
    %p151 = scmp.ne.s32.totalorder %s137, %s138
    %p152 = scmp.eq.s32.totalorder %s17, 1
    %p153 = por %p151, %p152
    %p155 = scmp.ne.s32.totalorder %s138, %s154
    %p156 = scmp.eq.s32.totalorder %s17, 0
    %p157 = por %p155, %p156
    %p158 = scmp.le.s32.totalorder 1, %s11
    %p159 = scmp.lt.s32.totalorder %s11, 3
    %p160 = pnand %p158, %p159
    %p161 = pneg %p160
    // Predicated region
    $region9: #{convolution_layer.2} parent=5 // pred_check
      _
    $region10: #{convolution_layer.2} parent=5 // pred_check_branch
      %163 = sbr.rel (%p160) target = $region12
    $region11: #{convolution_layer.2} parent=5 // pred_region
      %s164 = ssub.s32 %s11, 1
      // Predicated region
      $region13: #{convolution_layer.2} parent=11 // pred_check
        %p165 = pneg %p70
      $region14: #{convolution_layer.2} parent=11 // pred_check_branch
        %167 = sbr.rel (%p165) target = $region16
      $region15: #{convolution_layer.2} parent=11 // pred_region
        _
      $region16: #{convolution_layer.2} parent=11 // pred_fallthru
        _
    $region12: #{convolution_layer.2} parent=5 // pred_fallthru
      _
    %p168 = scmp.lt.s32.totalorder %s11, 2
    // Predicated region
    $region17: #{convolution_layer.2} parent=5 // pred_check
      %p169 = pneg %p168
    $region18: #{convolution_layer.2} parent=5 // pred_check_branch
      %171 = sbr.rel (%p169) target = $region20
    $region19: #{convolution_layer.2} parent=5 // pred_region
      // Predicated region
      $region21: #{convolution_layer.2} parent=19 // pred_check
        %p172 = pneg %p43
      $region22: #{convolution_layer.2} parent=19 // pred_check_branch
        %174 = sbr.rel (%p172) target = $region24
      $region23: #{convolution_layer.2} parent=19 // pred_region
        %p175 = scmp.lt.s32.totalorder %s18, 1
        %s176 = scalar_select %p175, %s18, 1
        %s177 = smul.addr %s176, 36
        %s178 = smul.addr %s177, 4
        %s179 = scalar_lea.vmem %s0, %s178
      $region24: #{convolution_layer.2} parent=19 // pred_fallthru
        _
    $region20: #{convolution_layer.2} parent=5 // pred_fallthru
      _
    %p180 = scmp.le.s32.totalorder 1, %s11
    %p181 = scmp.lt.s32.totalorder %s11, 3
    %p182 = pnand %p180, %p181
    %p183 = pneg %p182
    // Predicated region
    $region25: #{convolution_layer.2} parent=5 // pred_check
      _
    $region26: #{convolution_layer.2} parent=5 // pred_check_branch
      %185 = sbr.rel (%p182) target = $region28
    $region27: #{convolution_layer.2} parent=5 // pred_region
      %s186 = ssub.s32 %s11, 1
      %p187 = scmp.lt.s32.totalorder %s20, 1
      %s188 = scalar_select %p187, %s20, 1
      %s189 = smul.addr %s188, 36
      %s190 = smul.addr %s189, 4
      %s191 = scalar_lea.vmem %s0, %s190
      %p192 = pneg %p49
      %p193 = pneg %p46
      %p194 = pneg %p70
      %p195 = pneg %p67
      %p196 = pneg %p98
      %p197 = pneg %p95
      %s198 = smul.u32 2, %s21
      %p199 = scmp.lt.s32.totalorder %s20, 1
      %s200 = scalar_select %p199, %s20, 1
      %p201 = scmp.lt.s32.totalorder %s198, 1
      %s202 = scalar_select %p201, %s198, 1
      %s203 = smul.addr %s200, 2
      %s204 = sadd.s32 %s202, %s203
      %s205 = smul.addr %s204, 8
      %s206 = scalar_lea.vmem %s2, %s205
      %p207 = pneg %p124
      %p208 = pneg %p121
      %p209 = scmp.lt.s32.totalorder %s20, 1
      %s210 = scalar_select %p209, %s20, 1
      %s211 = scalar_lea.vmem %s3, %s210
      %p212 = pneg %p150
      %p213 = pneg %p147
      %p214 = scmp.lt.s32.totalorder %s20, 1
      %s215 = scalar_select %p214, %s20, 1
      %s216 = scalar_lea.vmem %s4, %s215
      %p217 = scmp.lt.s32.totalorder %s20, 1
      %s218 = scalar_select %p217, %s20, 1
      %s219 = smul.addr %s218, 36
      %s220 = smul.addr %s219, 4
      %s221 = scalar_lea.vmem %s0, %s220
      %s222 = smul.u32 2, %s21
      %p223 = scmp.lt.s32.totalorder %s20, 1
      %s224 = scalar_select %p223, %s20, 1
      %p225 = scmp.lt.s32.totalorder %s222, 1
      %s226 = scalar_select %p225, %s222, 1
      %s227 = smul.addr %s224, 2
      %s228 = sadd.s32 %s226, %s227
      %s229 = smul.addr %s228, 8
      %s230 = scalar_lea.vmem %s2, %s229
      %s231 = smul.u32 2, %s21
      %p232 = scmp.lt.s32.totalorder %s20, 1
      %s233 = scalar_select %p232, %s20, 1
      %s234 = scalar_lea.vmem %s3, %s233
      %p235 = scmp.lt.s32.totalorder %s20, 1
      %s236 = scalar_select %p235, %s20, 1
      %s237 = scalar_lea.vmem %s4, %s236
      %p239 = scmp.eq.s32.totalorder %s21, 0
      // Predicated region
      $region29: #{convolution_layer.2} parent=27 // pred_check
        %p240 = pneg %p239
      $region30: #{convolution_layer.2} parent=27 // pred_check_branch
        %242 = sbr.rel (%p240) target = $region32
      $region31: #{convolution_layer.2} parent=27 // pred_region
        %243 = vst [vmem:[%s234] sm:$0x1] 0.0
        %244 = vst [vmem:[%s237] sm:$0x1] 0.0
      $region32: #{convolution_layer.2} parent=27 // pred_fallthru
        _
      %s245 = smul.u32 %s21, 16
      %s246 = smul.u32 %s245, 2
      %s247 = smul.addr %s246, 4
      %s248 = scalar_lea.vmem %s221, %s247
      %v249 = vld [vmem:[%s248] sm:$0xf]
      %v250 = vld [vmem:[%s248 + $0x4] sm:$0xf]
      %v251 = vld [vmem:[%s248 + $0x8] sm:$0xf]
      %v252 = vld [vmem:[%s248 + $0xc] sm:$0xf]
      %v253 = vld [vmem:[%s248 + $0x10] sm:$0xf]
      %v254 = vld [vmem:[%s248 + $0x14] sm:$0xf]
      %v255 = vld [vmem:[%s248 + $0x18] sm:$0xf]
      %v256 = vld [vmem:[%s248 + $0x1c] sm:$0xf]
      %v257 = vld [vmem:[%s248 + $0x20] sm:$0xf]
      %v258 = vld [vmem:[%s248 + $0x24] sm:$0xf]
      %v259 = vld [vmem:[%s248 + $0x28] sm:$0xf]
      %v260 = vld [vmem:[%s248 + $0x2c] sm:$0xf]
      %v261 = vld [vmem:[%s248 + $0x30] sm:$0xf]
      %v262 = vld [vmem:[%s248 + $0x34] sm:$0xf]
      %v263 = vld [vmem:[%s248 + $0x38] sm:$0xf]
      %v264 = vld [vmem:[%s248 + $0x3c] sm:$0xf]
      %v265 = vld [vmem:[%s248 + $0x40] sm:$0xf]
      %v266 = vld [vmem:[%s248 + $0x44] sm:$0xf]
      %v267 = vld [vmem:[%s248 + $0x48] sm:$0xf]
      %v268 = vld [vmem:[%s248 + $0x4c] sm:$0xf]
      %v269 = vld [vmem:[%s248 + $0x50] sm:$0xf]
      %v270 = vld [vmem:[%s248 + $0x54] sm:$0xf]
      %v271 = vld [vmem:[%s248 + $0x58] sm:$0xf]
      %v272 = vld [vmem:[%s248 + $0x5c] sm:$0xf]
      %v273 = vld [vmem:[%s248 + $0x60] sm:$0xf]
      %v274 = vld [vmem:[%s248 + $0x64] sm:$0xf]
      %v275 = vld [vmem:[%s248 + $0x68] sm:$0xf]
      %v276 = vld [vmem:[%s248 + $0x6c] sm:$0xf]
      %v277 = vld [vmem:[%s248 + $0x70] sm:$0xf]
      %v278 = vld [vmem:[%s248 + $0x74] sm:$0xf]
      %v279 = vld [vmem:[%s248 + $0x78] sm:$0xf]
      %v280 = vld [vmem:[%s248 + $0x7c] sm:$0xf]
      %v281 = vld [vmem:[%s1] sm:$0xf]
      %v282 = vld [vmem:[%s1 + $0x4] sm:$0x3]
      %v315 = vunpack.c.l.b16 %v249
      %v316 = vunpack.c.l.b16 %v250
      %v317 = vunpack.c.l.b16 %v251
      %v318 = vunpack.c.l.b16 %v252
      %v319 = vunpack.c.l.b16 %v253
      %v320 = vunpack.c.l.b16 %v254
      %v321 = vunpack.c.l.b16 %v255
      %v322 = vunpack.c.l.b16 %v256
      %v323 = vunpack.c.l.b16 %v257
      %v324 = vunpack.c.l.b16 %v258
      %v325 = vunpack.c.l.b16 %v259
      %v326 = vunpack.c.l.b16 %v260
      %v327 = vunpack.c.l.b16 %v261
      %v328 = vunpack.c.l.b16 %v262
      %v329 = vunpack.c.l.b16 %v263
      %v330 = vunpack.c.l.b16 %v264
      %v331 = vunpack.c.l.b16 %v265
      %v332 = vunpack.c.l.b16 %v266
      %v333 = vunpack.c.l.b16 %v267
      %v334 = vunpack.c.l.b16 %v268
      %v335 = vunpack.c.l.b16 %v269
      %v336 = vunpack.c.l.b16 %v270
      %v337 = vunpack.c.l.b16 %v271
      %v338 = vunpack.c.l.b16 %v272
      %v339 = vunpack.c.l.b16 %v273
      %v340 = vunpack.c.l.b16 %v274
      %v341 = vunpack.c.l.b16 %v275
      %v342 = vunpack.c.l.b16 %v276
      %v343 = vunpack.c.l.b16 %v277
      %v344 = vunpack.c.l.b16 %v278
      %v345 = vunpack.c.l.b16 %v279
      %v346 = vunpack.c.l.b16 %v280
      %v347 = vpack.c.b16 %v316, %v315
      %v348 = vpack.c.b16 %v318, %v317
      %v349 = vpack.c.b16 %v320, %v319
      %v350 = vpack.c.b16 %v322, %v321
      %v351 = vpack.c.b16 %v324, %v323
      %v352 = vpack.c.b16 %v326, %v325
      %v353 = vpack.c.b16 %v328, %v327
      %v354 = vpack.c.b16 %v330, %v329
      %v355 = vpack.c.b16 %v332, %v331
      %v356 = vpack.c.b16 %v334, %v333
      %v357 = vpack.c.b16 %v336, %v335
      %v358 = vpack.c.b16 %v338, %v337
      %v359 = vpack.c.b16 %v340, %v339
      %v360 = vpack.c.b16 %v342, %v341
      %v361 = vpack.c.b16 %v344, %v343
      %v362 = vpack.c.b16 %v346, %v345
      %v365 = vunpack.c.l.b16 %v281
      %v366 = vunpack.c.l.b16 %v282
      %v367 = vpack.c.b16 %v366, %v365
      %vm368 = vcmask 97280
      %v370 = vsel %vm368, %v347, 0
      %v373 = vsel %vm368, %v348, 0
      %v376 = vsel %vm368, %v349, 0
      %v379 = vsel %vm368, %v350, 0
      %v382 = vsel %vm368, %v351, 0
      %v385 = vsel %vm368, %v352, 0
      %v388 = vsel %vm368, %v353, 0
      %v391 = vsel %vm368, %v354, 0
      %v394 = vsel %vm368, %v355, 0
      %v397 = vsel %vm368, %v356, 0
      %v400 = vsel %vm368, %v357, 0
      %v403 = vsel %vm368, %v358, 0
      %v406 = vsel %vm368, %v359, 0
      %v409 = vsel %vm368, %v360, 0
      %v412 = vsel %vm368, %v361, 0
      %v415 = vsel %vm368, %v362, 0
      %vm417 = vcmask 1045504
      %v419 = vsel %vm417, %v367, 0
      %421 = vmatpush.bf16.msra.mxu0 0
      %422 = vmatpush.bf16.msra.mxu0 0
      %423 = vmatpush.bf16.msra.mxu0 0
      %424 = vmatpush.bf16.msra.mxu0 0
      %425 = vmatpush.bf16.msra.mxu0 0
      %426 = vmatpush.bf16.msra.mxu0 0
      %427 = vmatpush.bf16.msra.mxu0 0
      %428 = vmatpush.bf16.msra.mxu0 %v419
      %429 = vmatmul.bf16.gmra.mxu0 %v370
      %v430 = vpop.f32.mrf.mxu0
      %v431 = vadd.f32 0.0, %v430
      %v432 = vpop.f32.mrf.mxu0
      %v433 = vadd.f32 0.0, %v432
      %434 = vmatmul.bf16.gmra.mxu0 %v373
      %v435 = vpop.f32.mrf.mxu0
      %v436 = vadd.f32 0.0, %v435
      %v437 = vpop.f32.mrf.mxu0
      %v438 = vadd.f32 0.0, %v437
      %439 = vmatmul.bf16.gmra.mxu0 %v376
      %v440 = vpop.f32.mrf.mxu0
      %v441 = vadd.f32 0.0, %v440
      %v442 = vpop.f32.mrf.mxu0
      %v443 = vadd.f32 0.0, %v442
      %444 = vmatmul.bf16.gmra.mxu0 %v379
      %v445 = vpop.f32.mrf.mxu0
      %v446 = vadd.f32 0.0, %v445
      %v447 = vpop.f32.mrf.mxu0
      %v448 = vadd.f32 0.0, %v447
      %449 = vmatmul.bf16.gmra.mxu0 %v382
      %v450 = vpop.f32.mrf.mxu0
      %v451 = vadd.f32 0.0, %v450
      %v452 = vpop.f32.mrf.mxu0
      %v453 = vadd.f32 0.0, %v452
      %454 = vmatmul.bf16.gmra.mxu0 %v385
      %v455 = vpop.f32.mrf.mxu0
      %v456 = vadd.f32 0.0, %v455
      %v457 = vpop.f32.mrf.mxu0
      %v458 = vadd.f32 0.0, %v457
      %459 = vmatmul.bf16.gmra.mxu0 %v388
      %v460 = vpop.f32.mrf.mxu0
      %v461 = vadd.f32 0.0, %v460
      %v462 = vpop.f32.mrf.mxu0
      %v463 = vadd.f32 0.0, %v462
      %464 = vmatmul.bf16.gmra.mxu0 %v391
      %v465 = vpop.f32.mrf.mxu0
      %v466 = vadd.f32 0.0, %v465
      %v467 = vpop.f32.mrf.mxu0
      %v468 = vadd.f32 0.0, %v467
      %469 = vmatmul.bf16.gmra.mxu0 %v394
      %v470 = vpop.f32.mrf.mxu0
      %v471 = vadd.f32 0.0, %v470
      %v472 = vpop.f32.mrf.mxu0
      %v473 = vadd.f32 0.0, %v472
      %474 = vmatmul.bf16.gmra.mxu0 %v397
      %v475 = vpop.f32.mrf.mxu0
      %v476 = vadd.f32 0.0, %v475
      %v477 = vpop.f32.mrf.mxu0
      %v478 = vadd.f32 0.0, %v477
      %479 = vmatmul.bf16.gmra.mxu0 %v400
      %v480 = vpop.f32.mrf.mxu0
      %v481 = vadd.f32 0.0, %v480
      %v482 = vpop.f32.mrf.mxu0
      %v483 = vadd.f32 0.0, %v482
      %484 = vmatmul.bf16.gmra.mxu0 %v403
      %v485 = vpop.f32.mrf.mxu0
      %v486 = vadd.f32 0.0, %v485
      %v487 = vpop.f32.mrf.mxu0
      %v488 = vadd.f32 0.0, %v487
      %489 = vmatmul.bf16.gmra.mxu0 %v406
      %v490 = vpop.f32.mrf.mxu0
      %v491 = vadd.f32 0.0, %v490
      %v492 = vpop.f32.mrf.mxu0
      %v493 = vadd.f32 0.0, %v492
      %494 = vmatmul.bf16.gmra.mxu0 %v409
      %v495 = vpop.f32.mrf.mxu0
      %v496 = vadd.f32 0.0, %v495
      %v497 = vpop.f32.mrf.mxu0
      %v498 = vadd.f32 0.0, %v497
      %499 = vmatmul.bf16.gmra.mxu0 %v412
      %v500 = vpop.f32.mrf.mxu0
      %v501 = vadd.f32 0.0, %v500
      %v502 = vpop.f32.mrf.mxu0
      %v503 = vadd.f32 0.0, %v502
      %504 = vmatmul.bf16.gmra.mxu0 %v415
      %v505 = vpop.f32.mrf.mxu0
      %v506 = vadd.f32 0.0, %v505
      %v507 = vpop.f32.mrf.mxu0
      %v508 = vadd.f32 0.0, %v507
      %509 = vdwg.mxu0
      %510 = vst [vmem:[#allocation2] sm:$0xff] %v431
      %511 = vst [vmem:[#allocation2 + $0x8] sm:$0xff] %v433
      %512 = vst [vmem:[#allocation2 + $0x10] sm:$0xff] %v436
      %513 = vst [vmem:[#allocation2 + $0x18] sm:$0xff] %v438
      %514 = vst [vmem:[#allocation2 + $0x20] sm:$0xff] %v441
      %515 = vst [vmem:[#allocation2 + $0x28] sm:$0xff] %v443
      %516 = vst [vmem:[#allocation2 + $0x30] sm:$0xff] %v446
      %517 = vst [vmem:[#allocation2 + $0x38] sm:$0xff] %v448
      %518 = vst [vmem:[#allocation2 + $0x40] sm:$0xff] %v451
      %519 = vst [vmem:[#allocation2 + $0x48] sm:$0xff] %v453
      %520 = vst [vmem:[#allocation2 + $0x50] sm:$0xff] %v456
      %521 = vst [vmem:[#allocation2 + $0x58] sm:$0xff] %v458
      %522 = vst [vmem:[#allocation2 + $0x60] sm:$0xff] %v461
      %523 = vst [vmem:[#allocation2 + $0x68] sm:$0xff] %v463
      %524 = vst [vmem:[#allocation2 + $0x70] sm:$0xff] %v466
      %525 = vst [vmem:[#allocation2 + $0x78] sm:$0xff] %v468
      %526 = vst [vmem:[#allocation2 + $0x80] sm:$0xff] %v471
      %527 = vst [vmem:[#allocation2 + $0x88] sm:$0xff] %v473
      %528 = vst [vmem:[#allocation2 + $0x90] sm:$0xff] %v476
      %529 = vst [vmem:[#allocation2 + $0x98] sm:$0xff] %v478
      %530 = vst [vmem:[#allocation2 + $0xa0] sm:$0xff] %v481
      %531 = vst [vmem:[#allocation2 + $0xa8] sm:$0xff] %v483
      %532 = vst [vmem:[#allocation2 + $0xb0] sm:$0xff] %v486
      %533 = vst [vmem:[#allocation2 + $0xb8] sm:$0xff] %v488
      %534 = vst [vmem:[#allocation2 + $0xc0] sm:$0xff] %v491
      %535 = vst [vmem:[#allocation2 + $0xc8] sm:$0xff] %v493
      %536 = vst [vmem:[#allocation2 + $0xd0] sm:$0xff] %v496
      %537 = vst [vmem:[#allocation2 + $0xd8] sm:$0xff] %v498
      %538 = vst [vmem:[#allocation2 + $0xe0] sm:$0xff] %v501
      %539 = vst [vmem:[#allocation2 + $0xe8] sm:$0xff] %v503
      %540 = vst [vmem:[#allocation2 + $0xf0] sm:$0xff] %v506
      %541 = vst [vmem:[#allocation2 + $0xf8] sm:$0xff] %v508
      %s542 = sadd.s32 %s245, 1
      %s543 = smul.u32 %s542, 2
      %s544 = smul.addr %s543, 4
      %s545 = scalar_lea.vmem %s221, %s544
      %v546 = vld [vmem:[%s545] sm:$0xf]
      %v547 = vld [vmem:[%s545 + $0x4] sm:$0xf]
      %v548 = vld [vmem:[%s545 + $0x8] sm:$0xf]
      %v549 = vld [vmem:[%s545 + $0xc] sm:$0xf]
      %v550 = vld [vmem:[%s545 + $0x10] sm:$0xf]
      %v551 = vld [vmem:[%s545 + $0x14] sm:$0xf]
      %v552 = vld [vmem:[%s545 + $0x18] sm:$0xf]
      %v553 = vld [vmem:[%s545 + $0x1c] sm:$0xf]
      %v554 = vld [vmem:[%s545 + $0x20] sm:$0xf]
      %v555 = vld [vmem:[%s545 + $0x24] sm:$0xf]
      %v556 = vld [vmem:[%s545 + $0x28] sm:$0xf]
      %v557 = vld [vmem:[%s545 + $0x2c] sm:$0xf]
      %v558 = vld [vmem:[%s545 + $0x30] sm:$0xf]
      %v559 = vld [vmem:[%s545 + $0x34] sm:$0xf]
      %v560 = vld [vmem:[%s545 + $0x38] sm:$0xf]
      %v561 = vld [vmem:[%s545 + $0x3c] sm:$0xf]
      %v562 = vld [vmem:[%s545 + $0x40] sm:$0xf]
      %v563 = vld [vmem:[%s545 + $0x44] sm:$0xf]
      %v564 = vld [vmem:[%s545 + $0x48] sm:$0xf]
      %v565 = vld [vmem:[%s545 + $0x4c] sm:$0xf]
      %v566 = vld [vmem:[%s545 + $0x50] sm:$0xf]
      %v567 = vld [vmem:[%s545 + $0x54] sm:$0xf]
      %v568 = vld [vmem:[%s545 + $0x58] sm:$0xf]
      %v569 = vld [vmem:[%s545 + $0x5c] sm:$0xf]
      %v570 = vld [vmem:[%s545 + $0x60] sm:$0xf]
      %v571 = vld [vmem:[%s545 + $0x64] sm:$0xf]
      %v572 = vld [vmem:[%s545 + $0x68] sm:$0xf]
      %v573 = vld [vmem:[%s545 + $0x6c] sm:$0xf]
      %v574 = vld [vmem:[%s545 + $0x70] sm:$0xf]
      %v575 = vld [vmem:[%s545 + $0x74] sm:$0xf]
      %v576 = vld [vmem:[%s545 + $0x78] sm:$0xf]
      %v577 = vld [vmem:[%s545 + $0x7c] sm:$0xf]
      %s578 = scalar_lea.vmem %s1, 8
      %v579 = vld [vmem:[%s578] sm:$0xf]
      %v580 = vld [vmem:[%s578 + $0x4] sm:$0x3]
      %v613 = vunpack.c.l.b16 %v546
      %v614 = vunpack.c.l.b16 %v547
      %v615 = vunpack.c.l.b16 %v548
      %v616 = vunpack.c.l.b16 %v549
      %v617 = vunpack.c.l.b16 %v550
      %v618 = vunpack.c.l.b16 %v551
      %v619 = vunpack.c.l.b16 %v552
      %v620 = vunpack.c.l.b16 %v553
      %v621 = vunpack.c.l.b16 %v554
      %v622 = vunpack.c.l.b16 %v555
      %v623 = vunpack.c.l.b16 %v556
      %v624 = vunpack.c.l.b16 %v557
      %v625 = vunpack.c.l.b16 %v558
      %v626 = vunpack.c.l.b16 %v559
      %v627 = vunpack.c.l.b16 %v560
      %v628 = vunpack.c.l.b16 %v561
      %v629 = vunpack.c.l.b16 %v562
      %v630 = vunpack.c.l.b16 %v563
      %v631 = vunpack.c.l.b16 %v564
      %v632 = vunpack.c.l.b16 %v565
      %v633 = vunpack.c.l.b16 %v566
      %v634 = vunpack.c.l.b16 %v567
      %v635 = vunpack.c.l.b16 %v568
      %v636 = vunpack.c.l.b16 %v569
      %v637 = vunpack.c.l.b16 %v570
      %v638 = vunpack.c.l.b16 %v571
      %v639 = vunpack.c.l.b16 %v572
      %v640 = vunpack.c.l.b16 %v573
      %v641 = vunpack.c.l.b16 %v574
      %v642 = vunpack.c.l.b16 %v575
      %v643 = vunpack.c.l.b16 %v576
      %v644 = vunpack.c.l.b16 %v577
      %v645 = vpack.c.b16 %v614, %v613
      %v646 = vpack.c.b16 %v616, %v615
      %v647 = vpack.c.b16 %v618, %v617
      %v648 = vpack.c.b16 %v620, %v619
      %v649 = vpack.c.b16 %v622, %v621
      %v650 = vpack.c.b16 %v624, %v623
      %v651 = vpack.c.b16 %v626, %v625
      %v652 = vpack.c.b16 %v628, %v627
      %v653 = vpack.c.b16 %v630, %v629
      %v654 = vpack.c.b16 %v632, %v631
      %v655 = vpack.c.b16 %v634, %v633
      %v656 = vpack.c.b16 %v636, %v635
      %v657 = vpack.c.b16 %v638, %v637
      %v658 = vpack.c.b16 %v640, %v639
      %v659 = vpack.c.b16 %v642, %v641
      %v660 = vpack.c.b16 %v644, %v643
      %v663 = vunpack.c.l.b16 %v579
      %v664 = vunpack.c.l.b16 %v580
      %v665 = vpack.c.b16 %v664, %v663
      %v667 = vsel %vm368, %v645, 0
      %v670 = vsel %vm368, %v646, 0
      %v673 = vsel %vm368, %v647, 0
      %v676 = vsel %vm368, %v648, 0
      %v679 = vsel %vm368, %v649, 0
      %v682 = vsel %vm368, %v650, 0
      %v685 = vsel %vm368, %v651, 0
      %v688 = vsel %vm368, %v652, 0
      %v691 = vsel %vm368, %v653, 0
      %v694 = vsel %vm368, %v654, 0
      %v697 = vsel %vm368, %v655, 0
      %v700 = vsel %vm368, %v656, 0
      %v703 = vsel %vm368, %v657, 0
      %v706 = vsel %vm368, %v658, 0
      %v709 = vsel %vm368, %v659, 0
      %v712 = vsel %vm368, %v660, 0
      %v715 = vsel %vm417, %v665, 0
      %717 = vmatpush.bf16.msra.mxu0 0
      %718 = vmatpush.bf16.msra.mxu0 0
      %719 = vmatpush.bf16.msra.mxu0 0
      %720 = vmatpush.bf16.msra.mxu0 0
      %721 = vmatpush.bf16.msra.mxu0 0
      %722 = vmatpush.bf16.msra.mxu0 0
      %723 = vmatpush.bf16.msra.mxu0 0
      %724 = vmatpush.bf16.msra.mxu0 %v715
      %725 = vmatmul.bf16.gmra.mxu0 %v667
      %v726 = vpop.f32.mrf.mxu0
      %v727 = vadd.f32 0.0, %v726
      %v728 = vpop.f32.mrf.mxu0
      %v729 = vadd.f32 0.0, %v728
      %730 = vmatmul.bf16.gmra.mxu0 %v670
      %v731 = vpop.f32.mrf.mxu0
      %v732 = vadd.f32 0.0, %v731
      %v733 = vpop.f32.mrf.mxu0
      %v734 = vadd.f32 0.0, %v733
      %735 = vmatmul.bf16.gmra.mxu0 %v673
      %v736 = vpop.f32.mrf.mxu0
      %v737 = vadd.f32 0.0, %v736
      %v738 = vpop.f32.mrf.mxu0
      %v739 = vadd.f32 0.0, %v738
      %740 = vmatmul.bf16.gmra.mxu0 %v676
      %v741 = vpop.f32.mrf.mxu0
      %v742 = vadd.f32 0.0, %v741
      %v743 = vpop.f32.mrf.mxu0
      %v744 = vadd.f32 0.0, %v743
      %745 = vmatmul.bf16.gmra.mxu0 %v679
      %v746 = vpop.f32.mrf.mxu0
      %v747 = vadd.f32 0.0, %v746
      %v748 = vpop.f32.mrf.mxu0
      %v749 = vadd.f32 0.0, %v748
      %750 = vmatmul.bf16.gmra.mxu0 %v682
      %v751 = vpop.f32.mrf.mxu0
      %v752 = vadd.f32 0.0, %v751
      %v753 = vpop.f32.mrf.mxu0
      %v754 = vadd.f32 0.0, %v753
      %755 = vmatmul.bf16.gmra.mxu0 %v685
      %v756 = vpop.f32.mrf.mxu0
      %v757 = vadd.f32 0.0, %v756
      %v758 = vpop.f32.mrf.mxu0
      %v759 = vadd.f32 0.0, %v758
      %760 = vmatmul.bf16.gmra.mxu0 %v688
      %v761 = vpop.f32.mrf.mxu0
      %v762 = vadd.f32 0.0, %v761
      %v763 = vpop.f32.mrf.mxu0
      %v764 = vadd.f32 0.0, %v763
      %765 = vmatmul.bf16.gmra.mxu0 %v691
      %v766 = vpop.f32.mrf.mxu0
      %v767 = vadd.f32 0.0, %v766
      %v768 = vpop.f32.mrf.mxu0
      %v769 = vadd.f32 0.0, %v768
      %770 = vmatmul.bf16.gmra.mxu0 %v694
      %v771 = vpop.f32.mrf.mxu0
      %v772 = vadd.f32 0.0, %v771
      %v773 = vpop.f32.mrf.mxu0
      %v774 = vadd.f32 0.0, %v773
      %775 = vmatmul.bf16.gmra.mxu0 %v697
      %v776 = vpop.f32.mrf.mxu0
      %v777 = vadd.f32 0.0, %v776
      %v778 = vpop.f32.mrf.mxu0
      %v779 = vadd.f32 0.0, %v778
      %780 = vmatmul.bf16.gmra.mxu0 %v700
      %v781 = vpop.f32.mrf.mxu0
      %v782 = vadd.f32 0.0, %v781
      %v783 = vpop.f32.mrf.mxu0
      %v784 = vadd.f32 0.0, %v783
      %785 = vmatmul.bf16.gmra.mxu0 %v703
      %v786 = vpop.f32.mrf.mxu0
      %v787 = vadd.f32 0.0, %v786
      %v788 = vpop.f32.mrf.mxu0
      %v789 = vadd.f32 0.0, %v788
      %790 = vmatmul.bf16.gmra.mxu0 %v706
      %v791 = vpop.f32.mrf.mxu0
      %v792 = vadd.f32 0.0, %v791
      %v793 = vpop.f32.mrf.mxu0
      %v794 = vadd.f32 0.0, %v793
      %795 = vmatmul.bf16.gmra.mxu0 %v709
      %v796 = vpop.f32.mrf.mxu0
      %v797 = vadd.f32 0.0, %v796
      %v798 = vpop.f32.mrf.mxu0
      %v799 = vadd.f32 0.0, %v798
      %800 = vmatmul.bf16.gmra.mxu0 %v712
      %v801 = vpop.f32.mrf.mxu0
      %v802 = vadd.f32 0.0, %v801
      %v803 = vpop.f32.mrf.mxu0
      %v804 = vadd.f32 0.0, %v803
      %805 = vdwg.mxu0
      %v806 = vld [vmem:[#allocation2] sm:$0xff]
      %v807 = vld [vmem:[#allocation2 + $0x8] sm:$0xff]
      %v808 = vld [vmem:[#allocation2 + $0x10] sm:$0xff]
      %v809 = vld [vmem:[#allocation2 + $0x18] sm:$0xff]
      %v810 = vld [vmem:[#allocation2 + $0x20] sm:$0xff]
      %v811 = vld [vmem:[#allocation2 + $0x28] sm:$0xff]
      %v812 = vld [vmem:[#allocation2 + $0x30] sm:$0xff]
      %v813 = vld [vmem:[#allocation2 + $0x38] sm:$0xff]
      %v814 = vld [vmem:[#allocation2 + $0x40] sm:$0xff]
      %v815 = vld [vmem:[#allocation2 + $0x48] sm:$0xff]
      %v816 = vld [vmem:[#allocation2 + $0x50] sm:$0xff]
      %v817 = vld [vmem:[#allocation2 + $0x58] sm:$0xff]
      %v818 = vld [vmem:[#allocation2 + $0x60] sm:$0xff]
      %v819 = vld [vmem:[#allocation2 + $0x68] sm:$0xff]
      %v820 = vld [vmem:[#allocation2 + $0x70] sm:$0xff]
      %v821 = vld [vmem:[#allocation2 + $0x78] sm:$0xff]
      %v822 = vld [vmem:[#allocation2 + $0x80] sm:$0xff]
      %v823 = vld [vmem:[#allocation2 + $0x88] sm:$0xff]
      %v824 = vld [vmem:[#allocation2 + $0x90] sm:$0xff]
      %v825 = vld [vmem:[#allocation2 + $0x98] sm:$0xff]
      %v826 = vld [vmem:[#allocation2 + $0xa0] sm:$0xff]
      %v827 = vld [vmem:[#allocation2 + $0xa8] sm:$0xff]
      %v828 = vld [vmem:[#allocation2 + $0xb0] sm:$0xff]
      %v829 = vld [vmem:[#allocation2 + $0xb8] sm:$0xff]
      %v830 = vld [vmem:[#allocation2 + $0xc0] sm:$0xff]
      %v831 = vld [vmem:[#allocation2 + $0xc8] sm:$0xff]
      %v832 = vld [vmem:[#allocation2 + $0xd0] sm:$0xff]
      %v833 = vld [vmem:[#allocation2 + $0xd8] sm:$0xff]
      %v834 = vld [vmem:[#allocation2 + $0xe0] sm:$0xff]
      %v835 = vld [vmem:[#allocation2 + $0xe8] sm:$0xff]
      %v836 = vld [vmem:[#allocation2 + $0xf0] sm:$0xff]
      %v837 = vld [vmem:[#allocation2 + $0xf8] sm:$0xff]
      %v838 = vadd.f32 %v806, %v727
      %v839 = vadd.f32 %v807, %v729
      %v840 = vadd.f32 %v808, %v732
      %v841 = vadd.f32 %v809, %v734
      %v842 = vadd.f32 %v810, %v737
      %v843 = vadd.f32 %v811, %v739
      %v844 = vadd.f32 %v812, %v742
      %v845 = vadd.f32 %v813, %v744
      %v846 = vadd.f32 %v814, %v747
      %v847 = vadd.f32 %v815, %v749
      %v848 = vadd.f32 %v816, %v752
      %v849 = vadd.f32 %v817, %v754
      %v850 = vadd.f32 %v818, %v757
      %v851 = vadd.f32 %v819, %v759
      %v852 = vadd.f32 %v820, %v762
      %v853 = vadd.f32 %v821, %v764
      %v854 = vadd.f32 %v822, %v767
      %v855 = vadd.f32 %v823, %v769
      %v856 = vadd.f32 %v824, %v772
      %v857 = vadd.f32 %v825, %v774
      %v858 = vadd.f32 %v826, %v777
      %v859 = vadd.f32 %v827, %v779
      %v860 = vadd.f32 %v828, %v782
      %v861 = vadd.f32 %v829, %v784
      %v862 = vadd.f32 %v830, %v787
      %v863 = vadd.f32 %v831, %v789
      %v864 = vadd.f32 %v832, %v792
      %v865 = vadd.f32 %v833, %v794
      %v866 = vadd.f32 %v834, %v797
      %v867 = vadd.f32 %v835, %v799
      %v868 = vadd.f32 %v836, %v802
      %v869 = vadd.f32 %v837, %v804
      %870 = vst [vmem:[#allocation2] sm:$0xff] %v838
      %871 = vst [vmem:[#allocation2 + $0x8] sm:$0xff] %v839
      %872 = vst [vmem:[#allocation2 + $0x10] sm:$0xff] %v840
      %873 = vst [vmem:[#allocation2 + $0x18] sm:$0xff] %v841
      %874 = vst [vmem:[#allocation2 + $0x20] sm:$0xff] %v842
      %875 = vst [vmem:[#allocation2 + $0x28] sm:$0xff] %v843
      %876 = vst [vmem:[#allocation2 + $0x30] sm:$0xff] %v844
      %877 = vst [vmem:[#allocation2 + $0x38] sm:$0xff] %v845
      %878 = vst [vmem:[#allocation2 + $0x40] sm:$0xff] %v846
      %879 = vst [vmem:[#allocation2 + $0x48] sm:$0xff] %v847
      %880 = vst [vmem:[#allocation2 + $0x50] sm:$0xff] %v848
      %881 = vst [vmem:[#allocation2 + $0x58] sm:$0xff] %v849
      %882 = vst [vmem:[#allocation2 + $0x60] sm:$0xff] %v850
      %883 = vst [vmem:[#allocation2 + $0x68] sm:$0xff] %v851
      %884 = vst [vmem:[#allocation2 + $0x70] sm:$0xff] %v852
      %885 = vst [vmem:[#allocation2 + $0x78] sm:$0xff] %v853
      %886 = vst [vmem:[#allocation2 + $0x80] sm:$0xff] %v854
      %887 = vst [vmem:[#allocation2 + $0x88] sm:$0xff] %v855
      %888 = vst [vmem:[#allocation2 + $0x90] sm:$0xff] %v856
      %889 = vst [vmem:[#allocation2 + $0x98] sm:$0xff] %v857
      %890 = vst [vmem:[#allocation2 + $0xa0] sm:$0xff] %v858
      %891 = vst [vmem:[#allocation2 + $0xa8] sm:$0xff] %v859
      %892 = vst [vmem:[#allocation2 + $0xb0] sm:$0xff] %v860
      %893 = vst [vmem:[#allocation2 + $0xb8] sm:$0xff] %v861
      %894 = vst [vmem:[#allocation2 + $0xc0] sm:$0xff] %v862
      %895 = vst [vmem:[#allocation2 + $0xc8] sm:$0xff] %v863
      %896 = vst [vmem:[#allocation2 + $0xd0] sm:$0xff] %v864
      %897 = vst [vmem:[#allocation2 + $0xd8] sm:$0xff] %v865
      %898 = vst [vmem:[#allocation2 + $0xe0] sm:$0xff] %v866
      %899 = vst [vmem:[#allocation2 + $0xe8] sm:$0xff] %v867
      %900 = vst [vmem:[#allocation2 + $0xf0] sm:$0xff] %v868
      %901 = vst [vmem:[#allocation2 + $0xf8] sm:$0xff] %v869
      %s902 = sadd.s32 %s245, 2
      %s903 = smul.u32 %s902, 2
      %s904 = smul.addr %s903, 4
      %s905 = scalar_lea.vmem %s221, %s904
      %v906 = vld [vmem:[%s905] sm:$0xf]
      %v907 = vld [vmem:[%s905 + $0x4] sm:$0xf]
      %v908 = vld [vmem:[%s905 + $0x8] sm:$0xf]
      %v909 = vld [vmem:[%s905 + $0xc] sm:$0xf]
      %v910 = vld [vmem:[%s905 + $0x10] sm:$0xf]
      %v911 = vld [vmem:[%s905 + $0x14] sm:$0xf]
      %v912 = vld [vmem:[%s905 + $0x18] sm:$0xf]
      %v913 = vld [vmem:[%s905 + $0x1c] sm:$0xf]
      %v914 = vld [vmem:[%s905 + $0x20] sm:$0xf]
      %v915 = vld [vmem:[%s905 + $0x24] sm:$0xf]
      %v916 = vld [vmem:[%s905 + $0x28] sm:$0xf]
      %v917 = vld [vmem:[%s905 + $0x2c] sm:$0xf]
      %v918 = vld [vmem:[%s905 + $0x30] sm:$0xf]
      %v919 = vld [vmem:[%s905 + $0x34] sm:$0xf]
      %v920 = vld [vmem:[%s905 + $0x38] sm:$0xf]
      %v921 = vld [vmem:[%s905 + $0x3c] sm:$0xf]
      %v922 = vld [vmem:[%s905 + $0x40] sm:$0xf]
      %v923 = vld [vmem:[%s905 + $0x44] sm:$0xf]
      %v924 = vld [vmem:[%s905 + $0x48] sm:$0xf]
      %v925 = vld [vmem:[%s905 + $0x4c] sm:$0xf]
      %v926 = vld [vmem:[%s905 + $0x50] sm:$0xf]
      %v927 = vld [vmem:[%s905 + $0x54] sm:$0xf]
      %v928 = vld [vmem:[%s905 + $0x58] sm:$0xf]
      %v929 = vld [vmem:[%s905 + $0x5c] sm:$0xf]
      %v930 = vld [vmem:[%s905 + $0x60] sm:$0xf]
      %v931 = vld [vmem:[%s905 + $0x64] sm:$0xf]
      %v932 = vld [vmem:[%s905 + $0x68] sm:$0xf]
      %v933 = vld [vmem:[%s905 + $0x6c] sm:$0xf]
      %v934 = vld [vmem:[%s905 + $0x70] sm:$0xf]
      %v935 = vld [vmem:[%s905 + $0x74] sm:$0xf]
      %v936 = vld [vmem:[%s905 + $0x78] sm:$0xf]
      %v937 = vld [vmem:[%s905 + $0x7c] sm:$0xf]
      %s938 = scalar_lea.vmem %s1, 16
      %v939 = vld [vmem:[%s938] sm:$0xf]
      %v940 = vld [vmem:[%s938 + $0x4] sm:$0x3]
      %v973 = vunpack.c.l.b16 %v906
      %v974 = vunpack.c.l.b16 %v907
      %v975 = vunpack.c.l.b16 %v908
      %v976 = vunpack.c.l.b16 %v909
      %v977 = vunpack.c.l.b16 %v910
      %v978 = vunpack.c.l.b16 %v911
      %v979 = vunpack.c.l.b16 %v912
      %v980 = vunpack.c.l.b16 %v913
      %v981 = vunpack.c.l.b16 %v914
      %v982 = vunpack.c.l.b16 %v915
      %v983 = vunpack.c.l.b16 %v916
      %v984 = vunpack.c.l.b16 %v917
      %v985 = vunpack.c.l.b16 %v918
      %v986 = vunpack.c.l.b16 %v919
      %v987 = vunpack.c.l.b16 %v920
      %v988 = vunpack.c.l.b16 %v921
      %v989 = vunpack.c.l.b16 %v922
      %v990 = vunpack.c.l.b16 %v923
      %v991 = vunpack.c.l.b16 %v924
      %v992 = vunpack.c.l.b16 %v925
      %v993 = vunpack.c.l.b16 %v926
      %v994 = vunpack.c.l.b16 %v927
      %v995 = vunpack.c.l.b16 %v928
      %v996 = vunpack.c.l.b16 %v929
      %v997 = vunpack.c.l.b16 %v930
      %v998 = vunpack.c.l.b16 %v931
      %v999 = vunpack.c.l.b16 %v932
      %v1000 = vunpack.c.l.b16 %v933
      %v1001 = vunpack.c.l.b16 %v934
      %v1002 = vunpack.c.l.b16 %v935
      %v1003 = vunpack.c.l.b16 %v936
      %v1004 = vunpack.c.l.b16 %v937
      %v1005 = vpack.c.b16 %v974, %v973
      %v1006 = vpack.c.b16 %v976, %v975
      %v1007 = vpack.c.b16 %v978, %v977
      %v1008 = vpack.c.b16 %v980, %v979
      %v1009 = vpack.c.b16 %v982, %v981
      %v1010 = vpack.c.b16 %v984, %v983
      %v1011 = vpack.c.b16 %v986, %v985
      %v1012 = vpack.c.b16 %v988, %v987
      %v1013 = vpack.c.b16 %v990, %v989
      %v1014 = vpack.c.b16 %v992, %v991
      %v1015 = vpack.c.b16 %v994, %v993
      %v1016 = vpack.c.b16 %v996, %v995
      %v1017 = vpack.c.b16 %v998, %v997
      %v1018 = vpack.c.b16 %v1000, %v999
      %v1019 = vpack.c.b16 %v1002, %v1001
      %v1020 = vpack.c.b16 %v1004, %v1003
      %v1023 = vunpack.c.l.b16 %v939
      %v1024 = vunpack.c.l.b16 %v940
      %v1025 = vpack.c.b16 %v1024, %v1023
      %v1027 = vsel %vm368, %v1005, 0
      %v1030 = vsel %vm368, %v1006, 0
      %v1033 = vsel %vm368, %v1007, 0
      %v1036 = vsel %vm368, %v1008, 0
      %v1039 = vsel %vm368, %v1009, 0
      %v1042 = vsel %vm368, %v1010, 0
      %v1045 = vsel %vm368, %v1011, 0
      %v1048 = vsel %vm368, %v1012, 0
      %v1051 = vsel %vm368, %v1013, 0
      %v1054 = vsel %vm368, %v1014, 0
      %v1057 = vsel %vm368, %v1015, 0
      %v1060 = vsel %vm368, %v1016, 0
      %v1063 = vsel %vm368, %v1017, 0
      %v1066 = vsel %vm368, %v1018, 0
      %v1069 = vsel %vm368, %v1019, 0
      %v1072 = vsel %vm368, %v1020, 0
      %v1075 = vsel %vm417, %v1025, 0
      %1077 = vmatpush.bf16.msra.mxu0 0
      %1078 = vmatpush.bf16.msra.mxu0 0
      %1079 = vmatpush.bf16.msra.mxu0 0
      %1080 = vmatpush.bf16.msra.mxu0 0
      %1081 = vmatpush.bf16.msra.mxu0 0
      %1082 = vmatpush.bf16.msra.mxu0 0
      %1083 = vmatpush.bf16.msra.mxu0 0
      %1084 = vmatpush.bf16.msra.mxu0 %v1075
      %1085 = vmatmul.bf16.gmra.mxu0 %v1027
      %v1086 = vpop.f32.mrf.mxu0
      %v1087 = vadd.f32 0.0, %v1086
      %v1088 = vpop.f32.mrf.mxu0
      %v1089 = vadd.f32 0.0, %v1088
      %1090 = vmatmul.bf16.gmra.mxu0 %v1030
      %v1091 = vpop.f32.mrf.mxu0
      %v1092 = vadd.f32 0.0, %v1091
      %v1093 = vpop.f32.mrf.mxu0
      %v1094 = vadd.f32 0.0, %v1093
      %1095 = vmatmul.bf16.gmra.mxu0 %v1033
      %v1096 = vpop.f32.mrf.mxu0
      %v1097 = vadd.f32 0.0, %v1096
      %v1098 = vpop.f32.mrf.mxu0
      %v1099 = vadd.f32 0.0, %v1098
      %1100 = vmatmul.bf16.gmra.mxu0 %v1036
      %v1101 = vpop.f32.mrf.mxu0
      %v1102 = vadd.f32 0.0, %v1101
      %v1103 = vpop.f32.mrf.mxu0
      %v1104 = vadd.f32 0.0, %v1103
      %1105 = vmatmul.bf16.gmra.mxu0 %v1039
      %v1106 = vpop.f32.mrf.mxu0
      %v1107 = vadd.f32 0.0, %v1106
      %v1108 = vpop.f32.mrf.mxu0
      %v1109 = vadd.f32 0.0, %v1108
      %1110 = vmatmul.bf16.gmra.mxu0 %v1042
      %v1111 = vpop.f32.mrf.mxu0
      %v1112 = vadd.f32 0.0, %v1111
      %v1113 = vpop.f32.mrf.mxu0
      %v1114 = vadd.f32 0.0, %v1113
      %1115 = vmatmul.bf16.gmra.mxu0 %v1045
      %v1116 = vpop.f32.mrf.mxu0
      %v1117 = vadd.f32 0.0, %v1116
      %v1118 = vpop.f32.mrf.mxu0
      %v1119 = vadd.f32 0.0, %v1118
      %1120 = vmatmul.bf16.gmra.mxu0 %v1048
      %v1121 = vpop.f32.mrf.mxu0
      %v1122 = vadd.f32 0.0, %v1121
      %v1123 = vpop.f32.mrf.mxu0
      %v1124 = vadd.f32 0.0, %v1123
      %1125 = vmatmul.bf16.gmra.mxu0 %v1051
      %v1126 = vpop.f32.mrf.mxu0
      %v1127 = vadd.f32 0.0, %v1126
      %v1128 = vpop.f32.mrf.mxu0
      %v1129 = vadd.f32 0.0, %v1128
      %1130 = vmatmul.bf16.gmra.mxu0 %v1054
      %v1131 = vpop.f32.mrf.mxu0
      %v1132 = vadd.f32 0.0, %v1131
      %v1133 = vpop.f32.mrf.mxu0
      %v1134 = vadd.f32 0.0, %v1133
      %1135 = vmatmul.bf16.gmra.mxu0 %v1057
      %v1136 = vpop.f32.mrf.mxu0
      %v1137 = vadd.f32 0.0, %v1136
      %v1138 = vpop.f32.mrf.mxu0
      %v1139 = vadd.f32 0.0, %v1138
      %1140 = vmatmul.bf16.gmra.mxu0 %v1060
      %v1141 = vpop.f32.mrf.mxu0
      %v1142 = vadd.f32 0.0, %v1141
      %v1143 = vpop.f32.mrf.mxu0
      %v1144 = vadd.f32 0.0, %v1143
      %1145 = vmatmul.bf16.gmra.mxu0 %v1063
      %v1146 = vpop.f32.mrf.mxu0
      %v1147 = vadd.f32 0.0, %v1146
      %v1148 = vpop.f32.mrf.mxu0
      %v1149 = vadd.f32 0.0, %v1148
      %1150 = vmatmul.bf16.gmra.mxu0 %v1066
      %v1151 = vpop.f32.mrf.mxu0
      %v1152 = vadd.f32 0.0, %v1151
      %v1153 = vpop.f32.mrf.mxu0
      %v1154 = vadd.f32 0.0, %v1153
      %1155 = vmatmul.bf16.gmra.mxu0 %v1069
      %v1156 = vpop.f32.mrf.mxu0
      %v1157 = vadd.f32 0.0, %v1156
      %v1158 = vpop.f32.mrf.mxu0
      %v1159 = vadd.f32 0.0, %v1158
      %1160 = vmatmul.bf16.gmra.mxu0 %v1072
      %v1161 = vpop.f32.mrf.mxu0
      %v1162 = vadd.f32 0.0, %v1161
      %v1163 = vpop.f32.mrf.mxu0
      %v1164 = vadd.f32 0.0, %v1163
      %1165 = vdwg.mxu0
      %v1166 = vld [vmem:[#allocation2] sm:$0xff]
      %v1167 = vld [vmem:[#allocation2 + $0x8] sm:$0xff]
      %v1168 = vld [vmem:[#allocation2 + $0x10] sm:$0xff]
      %v1169 = vld [vmem:[#allocation2 + $0x18] sm:$0xff]
      %v1170 = vld [vmem:[#allocation2 + $0x20] sm:$0xff]
      %v1171 = vld [vmem:[#allocation2 + $0x28] sm:$0xff]
      %v1172 = vld [vmem:[#allocation2 + $0x30] sm:$0xff]
      %v1173 = vld [vmem:[#allocation2 + $0x38] sm:$0xff]
      %v1174 = vld [vmem:[#allocation2 + $0x40] sm:$0xff]
      %v1175 = vld [vmem:[#allocation2 + $0x48] sm:$0xff]
      %v1176 = vld [vmem:[#allocation2 + $0x50] sm:$0xff]
      %v1177 = vld [vmem:[#allocation2 + $0x58] sm:$0xff]
      %v1178 = vld [vmem:[#allocation2 + $0x60] sm:$0xff]
      %v1179 = vld [vmem:[#allocation2 + $0x68] sm:$0xff]
      %v1180 = vld [vmem:[#allocation2 + $0x70] sm:$0xff]
      %v1181 = vld [vmem:[#allocation2 + $0x78] sm:$0xff]
      %v1182 = vld [vmem:[#allocation2 + $0x80] sm:$0xff]
      %v1183 = vld [vmem:[#allocation2 + $0x88] sm:$0xff]
      %v1184 = vld [vmem:[#allocation2 + $0x90] sm:$0xff]
      %v1185 = vld [vmem:[#allocation2 + $0x98] sm:$0xff]
      %v1186 = vld [vmem:[#allocation2 + $0xa0] sm:$0xff]
      %v1187 = vld [vmem:[#allocation2 + $0xa8] sm:$0xff]
      %v1188 = vld [vmem:[#allocation2 + $0xb0] sm:$0xff]
      %v1189 = vld [vmem:[#allocation2 + $0xb8] sm:$0xff]
      %v1190 = vld [vmem:[#allocation2 + $0xc0] sm:$0xff]
      %v1191 = vld [vmem:[#allocation2 + $0xc8] sm:$0xff]
      %v1192 = vld [vmem:[#allocation2 + $0xd0] sm:$0xff]
      %v1193 = vld [vmem:[#allocation2 + $0xd8] sm:$0xff]
      %v1194 = vld [vmem:[#allocation2 + $0xe0] sm:$0xff]
      %v1195 = vld [vmem:[#allocation2 + $0xe8] sm:$0xff]
      %v1196 = vld [vmem:[#allocation2 + $0xf0] sm:$0xff]
      %v1197 = vld [vmem:[#allocation2 + $0xf8] sm:$0xff]
      %v1198 = vadd.f32 %v1166, %v1087
      %v1199 = vadd.f32 %v1167, %v1089
      %v1200 = vadd.f32 %v1168, %v1092
      %v1201 = vadd.f32 %v1169, %v1094
      %v1202 = vadd.f32 %v1170, %v1097
      %v1203 = vadd.f32 %v1171, %v1099
      %v1204 = vadd.f32 %v1172, %v1102
      %v1205 = vadd.f32 %v1173, %v1104
      %v1206 = vadd.f32 %v1174, %v1107
      %v1207 = vadd.f32 %v1175, %v1109
      %v1208 = vadd.f32 %v1176, %v1112
      %v1209 = vadd.f32 %v1177, %v1114
      %v1210 = vadd.f32 %v1178, %v1117
      %v1211 = vadd.f32 %v1179, %v1119
      %v1212 = vadd.f32 %v1180, %v1122
      %v1213 = vadd.f32 %v1181, %v1124
      %v1214 = vadd.f32 %v1182, %v1127
      %v1215 = vadd.f32 %v1183, %v1129
      %v1216 = vadd.f32 %v1184, %v1132
      %v1217 = vadd.f32 %v1185, %v1134
      %v1218 = vadd.f32 %v1186, %v1137
      %v1219 = vadd.f32 %v1187, %v1139
      %v1220 = vadd.f32 %v1188, %v1142
      %v1221 = vadd.f32 %v1189, %v1144
      %v1222 = vadd.f32 %v1190, %v1147
      %v1223 = vadd.f32 %v1191, %v1149
      %v1224 = vadd.f32 %v1192, %v1152
      %v1225 = vadd.f32 %v1193, %v1154
      %v1226 = vadd.f32 %v1194, %v1157
      %v1227 = vadd.f32 %v1195, %v1159
      %v1228 = vadd.f32 %v1196, %v1162
      %v1229 = vadd.f32 %v1197, %v1164
      %1230 = vst [vmem:[#allocation2] sm:$0xff] %v1198
      %1231 = vst [vmem:[#allocation2 + $0x8] sm:$0xff] %v1199
      %1232 = vst [vmem:[#allocation2 + $0x10] sm:$0xff] %v1200
      %1233 = vst [vmem:[#allocation2 + $0x18] sm:$0xff] %v1201
      %1234 = vst [vmem:[#allocation2 + $0x20] sm:$0xff] %v1202
      %1235 = vst [vmem:[#allocation2 + $0x28] sm:$0xff] %v1203
      %1236 = vst [vmem:[#allocation2 + $0x30] sm:$0xff] %v1204
      %1237 = vst [vmem:[#allocation2 + $0x38] sm:$0xff] %v1205
      %1238 = vst [vmem:[#allocation2 + $0x40] sm:$0xff] %v1206
      %1239 = vst [vmem:[#allocation2 + $0x48] sm:$0xff] %v1207
      %1240 = vst [vmem:[#allocation2 + $0x50] sm:$0xff] %v1208
      %1241 = vst [vmem:[#allocation2 + $0x58] sm:$0xff] %v1209
      %1242 = vst [vmem:[#allocation2 + $0x60] sm:$0xff] %v1210
      %1243 = vst [vmem:[#allocation2 + $0x68] sm:$0xff] %v1211
      %1244 = vst [vmem:[#allocation2 + $0x70] sm:$0xff] %v1212
      %1245 = vst [vmem:[#allocation2 + $0x78] sm:$0xff] %v1213
      %1246 = vst [vmem:[#allocation2 + $0x80] sm:$0xff] %v1214
      %1247 = vst [vmem:[#allocation2 + $0x88] sm:$0xff] %v1215
      %1248 = vst [vmem:[#allocation2 + $0x90] sm:$0xff] %v1216
      %1249 = vst [vmem:[#allocation2 + $0x98] sm:$0xff] %v1217
      %1250 = vst [vmem:[#allocation2 + $0xa0] sm:$0xff] %v1218
      %1251 = vst [vmem:[#allocation2 + $0xa8] sm:$0xff] %v1219
      %1252 = vst [vmem:[#allocation2 + $0xb0] sm:$0xff] %v1220
      %1253 = vst [vmem:[#allocation2 + $0xb8] sm:$0xff] %v1221
      %1254 = vst [vmem:[#allocation2 + $0xc0] sm:$0xff] %v1222
      %1255 = vst [vmem:[#allocation2 + $0xc8] sm:$0xff] %v1223
      %1256 = vst [vmem:[#allocation2 + $0xd0] sm:$0xff] %v1224
      %1257 = vst [vmem:[#allocation2 + $0xd8] sm:$0xff] %v1225
      %1258 = vst [vmem:[#allocation2 + $0xe0] sm:$0xff] %v1226
      %1259 = vst [vmem:[#allocation2 + $0xe8] sm:$0xff] %v1227
      %1260 = vst [vmem:[#allocation2 + $0xf0] sm:$0xff] %v1228
      %1261 = vst [vmem:[#allocation2 + $0xf8] sm:$0xff] %v1229
      %v1262 = vld [vmem:[#allocation2] sm:$0xff]
      %v1263 = vld [vmem:[#allocation2 + $0x8] sm:$0xff]
      %v1264 = vld [vmem:[#allocation2 + $0x10] sm:$0xff]
      %v1265 = vld [vmem:[#allocation2 + $0x18] sm:$0xff]
      %v1266 = vld [vmem:[#allocation2 + $0x20] sm:$0xff]
      %v1267 = vld [vmem:[#allocation2 + $0x28] sm:$0xff]
      %v1268 = vld [vmem:[#allocation2 + $0x30] sm:$0xff]
      %v1269 = vld [vmem:[#allocation2 + $0x38] sm:$0xff]
      %v1270 = vld [vmem:[#allocation2 + $0x40] sm:$0xff]
      %v1271 = vld [vmem:[#allocation2 + $0x48] sm:$0xff]
      %v1272 = vld [vmem:[#allocation2 + $0x50] sm:$0xff]
      %v1273 = vld [vmem:[#allocation2 + $0x58] sm:$0xff]
      %v1274 = vld [vmem:[#allocation2 + $0x60] sm:$0xff]
      %v1275 = vld [vmem:[#allocation2 + $0x68] sm:$0xff]
      %v1276 = vld [vmem:[#allocation2 + $0x70] sm:$0xff]
      %v1277 = vld [vmem:[#allocation2 + $0x78] sm:$0xff]
      %v1278 = vld [vmem:[#allocation2 + $0x80] sm:$0xff]
      %v1279 = vld [vmem:[#allocation2 + $0x88] sm:$0xff]
      %v1280 = vld [vmem:[#allocation2 + $0x90] sm:$0xff]
      %v1281 = vld [vmem:[#allocation2 + $0x98] sm:$0xff]
      %v1282 = vld [vmem:[#allocation2 + $0xa0] sm:$0xff]
      %v1283 = vld [vmem:[#allocation2 + $0xa8] sm:$0xff]
      %v1284 = vld [vmem:[#allocation2 + $0xb0] sm:$0xff]
      %v1285 = vld [vmem:[#allocation2 + $0xb8] sm:$0xff]
      %v1286 = vld [vmem:[#allocation2 + $0xc0] sm:$0xff]
      %v1287 = vld [vmem:[#allocation2 + $0xc8] sm:$0xff]
      %v1288 = vld [vmem:[#allocation2 + $0xd0] sm:$0xff]
      %v1289 = vld [vmem:[#allocation2 + $0xd8] sm:$0xff]
      %v1290 = vld [vmem:[#allocation2 + $0xe0] sm:$0xff]
      %v1291 = vld [vmem:[#allocation2 + $0xe8] sm:$0xff]
      %v1292 = vld [vmem:[#allocation2 + $0xf0] sm:$0xff]
      %v1293 = vld [vmem:[#allocation2 + $0xf8] sm:$0xff]
      %v1294 = vld [vmem:[%s234] sm:$0x1]
      %v1295 = vadd.f32 %v1262, %v1263
      %v1296 = vadd.f32 %v1295, %v1264
      %v1297 = vadd.f32 %v1296, %v1265
      %v1298 = vadd.f32 %v1297, %v1266
      %v1299 = vadd.f32 %v1298, %v1267
      %v1300 = vadd.f32 %v1299, %v1268
      %v1301 = vadd.f32 %v1300, %v1269
      %v1302 = vadd.f32 %v1301, %v1270
      %v1303 = vadd.f32 %v1302, %v1271
      %v1304 = vadd.f32 %v1303, %v1272
      %v1305 = vadd.f32 %v1304, %v1273
      %v1306 = vadd.f32 %v1305, %v1274
      %v1307 = vadd.f32 %v1306, %v1275
      %v1308 = vadd.f32 %v1307, %v1276
      %v1309 = vadd.f32 %v1308, %v1277
      %v1310 = vadd.f32 %v1309, %v1278
      %v1311 = vadd.f32 %v1310, %v1279
      %v1312 = vadd.f32 %v1311, %v1280
      %v1313 = vadd.f32 %v1312, %v1281
      %v1314 = vadd.f32 %v1313, %v1282
      %v1315 = vadd.f32 %v1314, %v1283
      %v1316 = vadd.f32 %v1315, %v1284
      %v1317 = vadd.f32 %v1316, %v1285
      %v1318 = vadd.f32 %v1317, %v1286
      %v1319 = vadd.f32 %v1318, %v1287
      %v1320 = vadd.f32 %v1319, %v1288
      %v1321 = vadd.f32 %v1320, %v1289
      %v1322 = vadd.f32 %v1321, %v1290
      %v1323 = vadd.f32 %v1322, %v1291
      %v1324 = vadd.f32 %v1323, %v1292
      %v1325 = vadd.f32 %v1324, %v1293
      %v1326 = vrot.slane %v1325, 4
      %v1327 = vadd.f32 %v1325, %v1326
      %v1328 = vrot.slane %v1327, 2
      %v1329 = vadd.f32 %v1327, %v1328
      %v1330 = vrot.slane %v1329, 1
      %v1331 = vadd.f32 %v1329, %v1330
      %v1332 = vadd.f32 %v1294, %v1331
      %1333 = vst [vmem:[%s234] sm:$0x1] %v1332
      %v1334 = vld [vmem:[%s237] sm:$0x1]
      %v1335 = vmul.f32 %v1262, %v1262
      %v1336 = vmul.f32 %v1263, %v1263
      %v1337 = vmul.f32 %v1264, %v1264
      %v1338 = vmul.f32 %v1265, %v1265
      %v1339 = vmul.f32 %v1266, %v1266
      %v1340 = vmul.f32 %v1267, %v1267
      %v1341 = vmul.f32 %v1268, %v1268
      %v1342 = vmul.f32 %v1269, %v1269
      %v1343 = vmul.f32 %v1270, %v1270
      %v1344 = vmul.f32 %v1271, %v1271
      %v1345 = vmul.f32 %v1272, %v1272
      %v1346 = vmul.f32 %v1273, %v1273
      %v1347 = vmul.f32 %v1274, %v1274
      %v1348 = vmul.f32 %v1275, %v1275
      %v1349 = vmul.f32 %v1276, %v1276
      %v1350 = vmul.f32 %v1277, %v1277
      %v1351 = vmul.f32 %v1278, %v1278
      %v1352 = vmul.f32 %v1279, %v1279
      %v1353 = vmul.f32 %v1280, %v1280
      %v1354 = vmul.f32 %v1281, %v1281
      %v1355 = vmul.f32 %v1282, %v1282
      %v1356 = vmul.f32 %v1283, %v1283
      %v1357 = vmul.f32 %v1284, %v1284
      %v1358 = vmul.f32 %v1285, %v1285
      %v1359 = vmul.f32 %v1286, %v1286
      %v1360 = vmul.f32 %v1287, %v1287
      %v1361 = vmul.f32 %v1288, %v1288
      %v1362 = vmul.f32 %v1289, %v1289
      %v1363 = vmul.f32 %v1290, %v1290
      %v1364 = vmul.f32 %v1291, %v1291
      %v1365 = vmul.f32 %v1292, %v1292
      %v1366 = vmul.f32 %v1293, %v1293
      %v1367 = vadd.f32 %v1335, %v1336
      %v1368 = vadd.f32 %v1367, %v1337
      %v1369 = vadd.f32 %v1368, %v1338
      %v1370 = vadd.f32 %v1369, %v1339
      %v1371 = vadd.f32 %v1370, %v1340
      %v1372 = vadd.f32 %v1371, %v1341
      %v1373 = vadd.f32 %v1372, %v1342
      %v1374 = vadd.f32 %v1373, %v1343
      %v1375 = vadd.f32 %v1374, %v1344
      %v1376 = vadd.f32 %v1375, %v1345
      %v1377 = vadd.f32 %v1376, %v1346
      %v1378 = vadd.f32 %v1377, %v1347
      %v1379 = vadd.f32 %v1378, %v1348
      %v1380 = vadd.f32 %v1379, %v1349
      %v1381 = vadd.f32 %v1380, %v1350
      %v1382 = vadd.f32 %v1381, %v1351
      %v1383 = vadd.f32 %v1382, %v1352
      %v1384 = vadd.f32 %v1383, %v1353
      %v1385 = vadd.f32 %v1384, %v1354
      %v1386 = vadd.f32 %v1385, %v1355
      %v1387 = vadd.f32 %v1386, %v1356
      %v1388 = vadd.f32 %v1387, %v1357
      %v1389 = vadd.f32 %v1388, %v1358
      %v1390 = vadd.f32 %v1389, %v1359
      %v1391 = vadd.f32 %v1390, %v1360
      %v1392 = vadd.f32 %v1391, %v1361
      %v1393 = vadd.f32 %v1392, %v1362
      %v1394 = vadd.f32 %v1393, %v1363
      %v1395 = vadd.f32 %v1394, %v1364
      %v1396 = vadd.f32 %v1395, %v1365
      %v1397 = vadd.f32 %v1396, %v1366
      %v1398 = vrot.slane %v1397, 4
      %v1399 = vadd.f32 %v1397, %v1398
      %v1400 = vrot.slane %v1399, 2
      %v1401 = vadd.f32 %v1399, %v1400
      %v1402 = vrot.slane %v1401, 1
      %v1403 = vadd.f32 %v1401, %v1402
      %v1404 = vadd.f32 %v1334, %v1403
      %1405 = vst [vmem:[%s237] sm:$0x1] %v1404
      %1406 = vxpose.xlu0.b32.start [1/16] %v1262, 128
      %1407 = vxpose.xlu0.b32.cont [2/16] %v1263, 128
      %1408 = vxpose.xlu0.b32.cont [3/16] %v1264, 128
      %1409 = vxpose.xlu0.b32.cont [4/16] %v1265, 128
      %1410 = vxpose.xlu0.b32.cont [5/16] %v1266, 128
      %1411 = vxpose.xlu0.b32.cont [6/16] %v1267, 128
      %1412 = vxpose.xlu0.b32.cont [7/16] %v1268, 128
      %1413 = vxpose.xlu0.b32.cont [8/16] %v1269, 128
      %1414 = vxpose.xlu0.b32.cont [9/16] %v1270, 128
      %1415 = vxpose.xlu0.b32.cont [10/16] %v1271, 128
      %1416 = vxpose.xlu0.b32.cont [11/16] %v1272, 128
      %1417 = vxpose.xlu0.b32.cont [12/16] %v1273, 128
      %1418 = vxpose.xlu0.b32.cont [13/16] %v1274, 128
      %1419 = vxpose.xlu0.b32.cont [14/16] %v1275, 128
      %1420 = vxpose.xlu0.b32.cont [15/16] %v1276, 128
      %1421 = vxpose.xlu0.b32.end [16/16] %v1277, 128
      %v1422 = vpop.trf.xlu0
      %v1423 = vpop.trf.xlu0
      %v1424 = vpop.trf.xlu0
      %v1425 = vpop.trf.xlu0
      %v1426 = vpop.trf.xlu0
      %v1427 = vpop.trf.xlu0
      %v1428 = vpop.trf.xlu0
      %v1429 = vpop.trf.xlu0
      %v1430 = vpop.trf.xlu0
      %v1431 = vpop.trf.xlu0
      %v1432 = vpop.trf.xlu0
      %v1433 = vpop.trf.xlu0
      %v1434 = vpop.trf.xlu0
      %v1435 = vpop.trf.xlu0
      %v1436 = vpop.trf.xlu0
      %v1437 = vpop.trf.xlu0
      %1438 = vxpose.xlu0.b32.start [1/16] %v1278, 128
      %1439 = vxpose.xlu0.b32.cont [2/16] %v1279, 128
      %1440 = vxpose.xlu0.b32.cont [3/16] %v1280, 128
      %1441 = vxpose.xlu0.b32.cont [4/16] %v1281, 128
      %1442 = vxpose.xlu0.b32.cont [5/16] %v1282, 128
      %1443 = vxpose.xlu0.b32.cont [6/16] %v1283, 128
      %1444 = vxpose.xlu0.b32.cont [7/16] %v1284, 128
      %1445 = vxpose.xlu0.b32.cont [8/16] %v1285, 128
      %1446 = vxpose.xlu0.b32.cont [9/16] %v1286, 128
      %1447 = vxpose.xlu0.b32.cont [10/16] %v1287, 128
      %1448 = vxpose.xlu0.b32.cont [11/16] %v1288, 128
      %1449 = vxpose.xlu0.b32.cont [12/16] %v1289, 128
      %1450 = vxpose.xlu0.b32.cont [13/16] %v1290, 128
      %1451 = vxpose.xlu0.b32.cont [14/16] %v1291, 128
      %1452 = vxpose.xlu0.b32.cont [15/16] %v1292, 128
      %1453 = vxpose.xlu0.b32.end [16/16] %v1293, 128
      %v1454 = vpop.trf.xlu0
      %v1455 = vpop.trf.xlu0
      %v1456 = vpop.trf.xlu0
      %v1457 = vpop.trf.xlu0
      %v1458 = vpop.trf.xlu0
      %v1459 = vpop.trf.xlu0
      %v1460 = vpop.trf.xlu0
      %v1461 = vpop.trf.xlu0
      %v1462 = vpop.trf.xlu0
      %v1463 = vpop.trf.xlu0
      %v1464 = vpop.trf.xlu0
      %v1465 = vpop.trf.xlu0
      %v1466 = vpop.trf.xlu0
      %v1467 = vpop.trf.xlu0
      %v1468 = vpop.trf.xlu0
      %v1469 = vpop.trf.xlu0
      %1470 = vst [vmem:[%s230] sm:$0xff] %v1422
      %1471 = vst [vmem:[%s230 + $0x8] sm:$0xff] %v1454
      %s1472 = smul.u32 2, %s21
      %p1473 = scmp.lt.s32.totalorder %s20, 1
      %s1474 = scalar_select %p1473, %s20, 1
      %p1475 = scmp.lt.s32.totalorder %s1472, 1
      %s1476 = scalar_select %p1475, %s1472, 1
      %s1477 = smul.addr %s1474, 2
      %s1478 = sadd.s32 %s1476, %s1477
      %s1479 = smul.addr %s1478, 8
      %s1480 = scalar_lea.vmem %s2, %s1479
      %p1481 = scmp.lt.s32.totalorder %s20, 1
      %s1482 = scalar_select %p1481, %s20, 1
      %s1483 = scalar_lea.vmem %s3, %s1482
      %p1484 = scmp.lt.s32.totalorder %s20, 1
      %s1485 = scalar_select %p1484, %s20, 1
      %s1486 = scalar_lea.vmem %s4, %s1485
      // Predicated region
      $region33: #{convolution_layer.2} parent=27 // pred_check
        %p1487 = pneg %p95
      $region34: #{convolution_layer.2} parent=27 // pred_check_branch
        %1489 = sbr.rel (%p1487) target = $region36
      $region35: #{convolution_layer.2} parent=27 // pred_region
        %s1490 = smul.u32 2, %s21
      $region36: #{convolution_layer.2} parent=27 // pred_fallthru
        _
      // Predicated region
      $region37: #{convolution_layer.2} parent=27 // pred_check
        %p1491 = pneg %p121
      $region38: #{convolution_layer.2} parent=27 // pred_check_branch
        %1493 = sbr.rel (%p1491) target = $region40
      $region39: #{convolution_layer.2} parent=27 // pred_region
        _
      $region40: #{convolution_layer.2} parent=27 // pred_fallthru
        _
      // Predicated region
      $region41: #{convolution_layer.2} parent=27 // pred_check
        %p1494 = pneg %p147
      $region42: #{convolution_layer.2} parent=27 // pred_check_branch
        %1496 = sbr.rel (%p1494) target = $region44
      $region43: #{convolution_layer.2} parent=27 // pred_region
        _
      $region44: #{convolution_layer.2} parent=27 // pred_fallthru
        _
    $region28: #{convolution_layer.2} parent=5 // pred_fallthru
      _
    %p1497 = scmp.le.s32.totalorder 2, %s11
    // Predicated region
    $region45: #{convolution_layer.2} parent=5 // pred_check
      %p1498 = pneg %p1497
    $region46: #{convolution_layer.2} parent=5 // pred_check_branch
      %1500 = sbr.rel (%p1498) target = $region48
    $region47: #{convolution_layer.2} parent=5 // pred_region
      %s1501 = ssub.s32 %s11, 2
      // Predicated region
      $region49: #{convolution_layer.2} parent=47 // pred_check
        %p1502 = pneg %p101
      $region50: #{convolution_layer.2} parent=47 // pred_check_branch
        %1504 = sbr.rel (%p1502) target = $region52
      $region51: #{convolution_layer.2} parent=47 // pred_region
        %s1505 = smul.u32 2, %s23
        %p1506 = scmp.lt.s32.totalorder %s22, 1
        %s1507 = scalar_select %p1506, %s22, 1
        %p1508 = scmp.lt.s32.totalorder %s1505, 1
        %s1509 = scalar_select %p1508, %s1505, 1
        %s1510 = smul.addr %s1507, 2
        %s1511 = sadd.s32 %s1509, %s1510
        %s1512 = smul.addr %s1511, 8
        %s1513 = scalar_lea.vmem %s2, %s1512
      $region52: #{convolution_layer.2} parent=47 // pred_fallthru
        _
      // Predicated region
      $region53: #{convolution_layer.2} parent=47 // pred_check
        %p1514 = pneg %p127
      $region54: #{convolution_layer.2} parent=47 // pred_check_branch
        %1516 = sbr.rel (%p1514) target = $region56
      $region55: #{convolution_layer.2} parent=47 // pred_region
        %p1517 = scmp.lt.s32.totalorder %s22, 1
        %s1518 = scalar_select %p1517, %s22, 1
        %s1519 = scalar_lea.vmem %s3, %s1518
      $region56: #{convolution_layer.2} parent=47 // pred_fallthru
        _
      // Predicated region
      $region57: #{convolution_layer.2} parent=47 // pred_check
        %p1520 = pneg %p153
      $region58: #{convolution_layer.2} parent=47 // pred_check_branch
        %1522 = sbr.rel (%p1520) target = $region60
      $region59: #{convolution_layer.2} parent=47 // pred_region
        %p1523 = scmp.lt.s32.totalorder %s22, 1
        %s1524 = scalar_select %p1523, %s22, 1
        %s1525 = scalar_lea.vmem %s4, %s1524
      $region60: #{convolution_layer.2} parent=47 // pred_fallthru
        _
    $region48: #{convolution_layer.2} parent=5 // pred_fallthru
      _
  $region6: #{convolution_layer.2} parent=0 // loop_footer
    %s15 = sadd.s32 1, %s11
  $region7: #{convolution_layer.2} parent=0 // loop_footer_branch
    %10 = sbr.rel target = $region3
  $region8: #{convolution_layer.2} parent=0 // loop_exit
    _

</llo_original>
